<compile_context>
chip_gen: v7x
topology: tpu7x:2x2x1
jax: 0.10.0
libtpu: 0.0.40
codegen_flags: <defaults>
</compile_context>

<pallas_src>
import functools

import jax
import jax.numpy as jnp
from jax import lax
from jax.experimental import pallas as pl
from jax.experimental.pallas import tpu as pltpu

# ------------------------- small synthetic configuration -------------------------
B = 2            # batch
C_IN_VID = 4     # raw video channels
T_VID = 4        # seq_len (raw frames)
H_VID = W_VID = 8
IN_C = 16        # backbone output channels (self.in_c)
HIDDEN = 32      # args.channel == hidden_dim == slot_dim
NUM_CLASS = 8    # num_actor_class (allocated slots kept)
NUM_SLOTS = 10   # total slots (bg_slot=False)
T_FEAT, H_FEAT, W_FEAT = 2, 2, 2     # backbone feature resolution (new_seq_len, new_h, new_w)
UP = 4                               # F.interpolate scale_factor=4
H_UP, W_UP = H_FEAT * UP, W_FEAT * UP
P_SMALL = T_FEAT * H_FEAT * W_FEAT   # 8 pre-upsample positions
N_TOKENS = T_FEAT * H_UP * W_UP      # 2*8*8 = 128 tokens (lane-dense)
EPS_SLOT = 1e-8
LN_EPS = 1e-5
SCALE = HIDDEN ** -0.5


# ------------------------------- fused Pallas kernel ------------------------------
def action_slot_kernel(feat_ref, bn_ref, convw_ref, convb_ref, up_ref, pe_ref,
                       wtok_ref, btok_ref, wkv_ref, bkv_ref,
                       lntokg_ref, lntokb_ref, wslot_ref, bslot_ref,
                       lnslotg_ref, lnslotb_ref, slots_ref,
                       headw_ref, headb_ref, logits_ref, attn_ref):
    # ---- conv3d block: ReLU -> BatchNorm3d(eval, folded) -> Conv3d 1x1x1 -> ReLU ----
    # channels-first (IN_C, P_small): per-channel scale/shift broadcasts along lanes.
    h = jnp.maximum(feat_ref[0], 0.0)                                   # (IN_C, P)
    h = h * bn_ref[0] + bn_ref[1]
    f = jnp.dot(convw_ref[...], h, preferred_element_type=jnp.float32) + convb_ref[...]
    f = jnp.maximum(f, 0.0)                                             # (HIDDEN, P)

    # ---- F.interpolate(x4, bilinear, align_corners=True) fused as one matmul ----
    tokens = jnp.dot(f, up_ref[...], preferred_element_type=jnp.float32)  # (HIDDEN, N)

    # ---- token-side helpers: feature dim on sublanes, 128 tokens on lanes ----
    def ln_tok(t, idx):
        mu = jnp.mean(t, axis=0, keepdims=True)
        var = jnp.mean(jnp.square(t - mu), axis=0, keepdims=True)
        return (t - mu) * lax.rsqrt(var + LN_EPS) * lntokg_ref[idx] + lntokb_ref[idx]

    def lin_tok(t, idx):
        return (jnp.dot(wtok_ref[idx], t, preferred_element_type=jnp.float32)
                + btok_ref[idx])

    # SoftPositionEmbed3D: inputs + embedding(grid)
    x = tokens + pe_ref[...]                            # (HIDDEN, N)
    x = ln_tok(x, 0)                                    # self.LN
    x = jnp.maximum(lin_tok(x, 0), 0.0)                 # FC1 + relu
    x = lin_tok(x, 1)                                   # FC2
    x = ln_tok(x, 1)                                    # norm_input

    # fused to_k / to_v projection: one (2D, D) matmul, then slice
    kv = jnp.dot(wkv_ref[...], x, preferred_element_type=jnp.float32) + bkv_ref[...]
    k = kv[:HIDDEN, :]                                  # (HIDDEN, N)
    v = kv[HIDDEN:, :]                                  # (HIDDEN, N)

    # ---- slot side: (S, HIDDEN) layout ----
    def ln_slot(t, idx):
        mu = jnp.mean(t, axis=-1, keepdims=True)
        var = jnp.mean(jnp.square(t - mu), axis=-1, keepdims=True)
        return (t - mu) * lax.rsqrt(var + LN_EPS) * lnslotg_ref[idx] + lnslotb_ref[idx]

    def lin_slot(t, idx):
        return (jnp.dot(t, wslot_ref[idx], preferred_element_type=jnp.float32)
                + bslot_ref[idx])

    s = ln_slot(slots_ref[...], 0)                      # norm_slots
    q = lin_slot(s, 0)                                  # to_q, (S, HIDDEN)

    dots = jnp.dot(q, k, preferred_element_type=jnp.float32) * SCALE     # (S, N)
    # softmax over the slot axis (torch dim=1 == axis 0 here), then + eps
    m = jnp.max(dots, axis=0, keepdims=True)
    e = jnp.exp(dots - m)
    attn_ori = e * pl.reciprocal(jnp.sum(e, axis=0, keepdims=True), approx=True) + EPS_SLOT
    attn_ref[0] = attn_ori                              # returned attention masks

    attn = attn_ori * pl.reciprocal(jnp.sum(attn_ori, axis=1, keepdims=True), approx=True)
    updates = lax.dot_general(attn, v, (((1,), (1,)), ((), ())),
                              preferred_element_type=jnp.float32)         # (S, HIDDEN)
    sl = updates[:NUM_CLASS, :]                         # allocated slots
    y = ln_slot(sl, 1)                                  # norm_pre_ff
    y = lin_slot(jnp.maximum(lin_slot(y, 1), 0.0), 2)   # fc2(relu(fc1(.)))
    sl = sl + y

    # TODO(synk): Allocated_Head class is not provided in the source; implemented as
    # a per-allocated-slot linear producing one logit per class.
    logits = jnp.sum(sl * headw_ref[...], axis=1)       # (NUM_CLASS,)
    logits_ref[...] = logits.reshape(1, 1, NUM_CLASS) + headb_ref[...].reshape(1, 1, NUM_CLASS)


def _bcast_spec(shape):
    nd = len(shape)
    return pl.BlockSpec(shape, lambda b, nd=nd: (0,) * nd)


def action_slot_fused_call(feat, p, up_mat, pe_t):
    bsz = feat.shape[0]
    in_arrays = [feat, p["bn"], p["conv_w"], p["conv_b"], up_mat, pe_t,
                 p["w_tok"], p["b_tok"], p["w_kv"], p["b_kv"],
                 p["ln_tok_g"], p["ln_tok_b"], p["w_slot"], p["b_slot"],
                 p["ln_slot_g"], p["ln_slot_b"], p["slots"],
                 p["head_w"], p["head_b"]]
    in_specs = [pl.BlockSpec((1, IN_C, P_SMALL), lambda b: (b, 0, 0))]
    in_specs += [_bcast_spec(a.shape) for a in in_arrays[1:]]
    logits, attn = pl.pallas_call(
        action_slot_kernel,
        out_shape=(jax.ShapeDtypeStruct((bsz, 1, NUM_CLASS), jnp.float32),
                   jax.ShapeDtypeStruct((bsz, NUM_SLOTS, N_TOKENS), jnp.float32)),
        grid=(bsz,),
        in_specs=in_specs,
        out_specs=(pl.BlockSpec((1, 1, NUM_CLASS), lambda b: (b, 0, 0)),
                   pl.BlockSpec((1, NUM_SLOTS, N_TOKENS), lambda b: (b, 0, 0))),
        compiler_params=pltpu.CompilerParams(dimension_semantics=("parallel",)),
    )(*in_arrays)
    return logits[:, 0, :], attn


# --------------------------------- JAX glue ---------------------------------------
def build_3d_grid(resolution):
    ranges = [jnp.linspace(0.0, 1.0, r) for r in resolution]
    g = jnp.stack(jnp.meshgrid(*ranges, indexing="ij"), axis=-1)
    g = g.reshape(resolution[0], resolution[1], resolution[2], -1)[None]
    return jnp.concatenate([g, 1.0 - g], axis=-1)        # (1, T, H, W, 6)


def interp_matrix_align_corners(out_size, in_size):
    if in_size == 1:
        return jnp.ones((out_size, 1), jnp.float32)
    src = jnp.arange(out_size) * (in_size - 1) / (out_size - 1)
    i0 = jnp.clip(jnp.floor(src).astype(jnp.int32), 0, in_size - 2)
    w1 = src - i0
    w0 = 1.0 - w1
    m = jnp.zeros((out_size, in_size), jnp.float32)
    rows = jnp.arange(out_size)
    m = m.at[rows, i0].add(w0)
    m = m.at[rows, i0 + 1].add(w1)
    return m


def interp_matrix_half_pixel(out_size, in_size):
    src = (jnp.arange(out_size) + 0.5) * (in_size / out_size) - 0.5
    src = jnp.maximum(src, 0.0)
    i0 = jnp.minimum(jnp.floor(src).astype(jnp.int32), in_size - 1)
    i1 = jnp.minimum(i0 + 1, in_size - 1)
    w1 = src - i0.astype(jnp.float32)
    w0 = 1.0 - w1
    m = jnp.zeros((out_size, in_size), jnp.float32)
    rows = jnp.arange(out_size)
    m = m.at[rows, i0].add(w0)
    m = m.at[rows, i1].add(w1)
    return m


def init_params(key):
    ks = jax.random.split(key, 24)
    p = {}
    p["backbone_proj"] = 0.1 * jax.random.normal(ks[0], (C_IN_VID, IN_C), jnp.float32)
    # conv3d block: BatchNorm3d(IN_C) (eval stats, folded) + Conv3d(IN_C, HIDDEN, 1x1x1)
    gamma = 1.0 + 0.1 * jax.random.normal(ks[1], (IN_C,))
    beta = 0.1 * jax.random.normal(ks[2], (IN_C,))
    rmean = 0.1 * jax.random.normal(ks[3], (IN_C,))
    rvar = jnp.abs(jax.random.normal(ks[4], (IN_C,))) + 0.5
    scale = gamma / jnp.sqrt(rvar + 1e-5)
    shift = beta - rmean * scale
    p["bn"] = jnp.stack([scale, shift], axis=0).reshape(2, IN_C, 1).astype(jnp.float32)
    # conv weight stored (out, in) for the channels-first (C, P) layout
    p["conv_w"] = 0.1 * jax.random.normal(ks[5], (HIDDEN, IN_C), jnp.float32)
    p["conv_b"] = 0.1 * jax.random.normal(ks[6], (HIDDEN, 1), jnp.float32)
    # SoftPositionEmbed3D: Linear(6, HIDDEN)
    p["pe_w"] = 0.1 * jax.random.normal(ks[7], (6, HIDDEN), jnp.float32)
    p["pe_b"] = 0.1 * jax.random.normal(ks[8], (HIDDEN,), jnp.float32)
    std = HIDDEN ** -0.5
    # token-side linears [FC1, FC2] stored (out, in); biases as (out, 1) columns
    p["w_tok"] = std * jax.random.normal(ks[9], (2, HIDDEN, HIDDEN), jnp.float32)
    p["b_tok"] = 0.02 * jax.random.normal(ks[10], (2, HIDDEN, 1), jnp.float32)
    # fused [to_k; to_v] projection: one (2D, D) weight, (2D, 1) bias
    p["w_kv"] = std * jax.random.normal(ks[11], (2 * HIDDEN, HIDDEN), jnp.float32)
    p["b_kv"] = 0.02 * jax.random.normal(ks[12], (2 * HIDDEN, 1), jnp.float32)
    # slot-side linears [to_q, fc1, fc2] stored (in, out); biases as (1, out) rows
    p["w_slot"] = std * jax.random.normal(ks[13], (3, HIDDEN, HIDDEN), jnp.float32)
    p["b_slot"] = 0.02 * jax.random.normal(ks[14], (3, 1, HIDDEN), jnp.float32)
    # 4 layernorms, default init gamma=1 beta=0: [LN, norm_input] / [norm_slots, norm_pre_ff]
    p["ln_tok_g"] = jnp.ones((2, HIDDEN, 1), jnp.float32)
    p["ln_tok_b"] = jnp.zeros((2, HIDDEN, 1), jnp.float32)
    p["ln_slot_g"] = jnp.ones((2, 1, HIDDEN), jnp.float32)
    p["ln_slot_b"] = jnp.zeros((2, 1, HIDDEN), jnp.float32)
    # slots buffer = normal(mu, |sigma|) broadcast over slots
    mu = jax.random.normal(ks[15], (1, 1, HIDDEN))
    sigma = jnp.abs(jax.random.normal(ks[16], (1, 1, HIDDEN)))
    noise = jax.random.normal(ks[17], (1, NUM_SLOTS, HIDDEN))
    p["slots"] = (mu + sigma * noise)[0].astype(jnp.float32)      # (S, D)
    # synthetic Allocated_Head weights
    p["head_w"] = 0.1 * jax.random.normal(ks[18], (NUM_CLASS, HIDDEN), jnp.float32)
    p["head_b"] = 0.1 * jax.random.normal(ks[19], (1, NUM_CLASS), jnp.float32)
    return p


def action_slot_forward(x, p):
    # x: (B, C, T, H, W) raw video, matching the PyTorch module input convention.
    x = jnp.transpose(x, (2, 0, 1, 3, 4))          # permute(2, 0, 1, 3, 4)
    seq_len, batch = x.shape[0], x.shape[1]
    x = jnp.transpose(x, (1, 2, 0, 3, 4))          # permute((1, 2, 0, 3, 4)) -> (B,C,T,H,W)

    # TODO(synk): pretrained x3d/slowfast torch.hub backbone is not translatable;
    # substituted with deterministic avg-pooling + fixed channel projection.
    bv, cv, tv, hv, wv = x.shape
    x = x.reshape(bv, cv, T_FEAT, tv // T_FEAT, H_FEAT, hv // H_FEAT, W_FEAT, wv // W_FEAT)
    x = x.mean(axis=(3, 5, 7))                                     # (B, Cv, T', H', W')
    x = jnp.einsum("bcthw,co->bothw", x, p["backbone_proj"])       # (B, IN_C, T', H', W')

    # self.drop: Dropout(0.5), eval mode -> identity
    feat = x.reshape(batch, IN_C, P_SMALL)                         # channels-first rows

    # bilinear x4 (align_corners=True) upsample fused into one (P_small, N) matrix
    mh = interp_matrix_align_corners(H_UP, H_FEAT)
    mw = interp_matrix_align_corners(W_UP, W_FEAT)
    up = jnp.einsum("tu,oh,pw->thwuop", jnp.eye(T_FEAT, dtype=jnp.float32), mh, mw)
    up = up.reshape(P_SMALL, N_TOKENS)                             # (8, 128)

    # SoftPositionEmbed3D grid embedding, pre-transposed to (HIDDEN, N) for lane density
    grid = build_3d_grid((T_FEAT, H_UP, W_UP))
    pe = (grid.reshape(-1, 6) @ p["pe_w"] + p["pe_b"]).astype(jnp.float32)
    pe_t = pe.T                                                    # (HIDDEN, N)

    logits, attn = action_slot_fused_call(feat, p, up, pe_t)

    # attention-mask reshaping + trilinear (temporal) upsample, as in forward()
    n_sl = attn.shape[1]
    masks = attn.reshape(batch, n_sl, T_FEAT, H_UP, W_UP)
    masks = masks.reshape(batch * n_sl, 1, T_FEAT, H_UP, W_UP)
    if seq_len > T_FEAT:
        mt = interp_matrix_half_pixel(seq_len, T_FEAT)             # spatial dims unchanged
        masks = jnp.einsum("ot,mctij->mcoij", mt, masks)
    masks = masks.reshape(batch, n_sl, seq_len, H_UP, W_UP)
    masks = jnp.transpose(masks, (0, 2, 1, 3, 4))                  # (B, T, n_slots, H, W)
    return logits, masks


if __name__ == "__main__":
    key = jax.random.PRNGKey(0)
    kx, kp = jax.random.split(key)
    x = jax.random.normal(kx, (B, C_IN_VID, T_VID, H_VID, W_VID), jnp.float32)
    params = init_params(kp)

    fwd = jax.jit(functools.partial(action_slot_forward, p=params))
    logits, attn_masks = fwd(x)
    jax.block_until_ready((logits, attn_masks))

    assert logits.shape == (B, NUM_CLASS), logits.shape
    assert attn_masks.shape == (B, T_VID, NUM_SLOTS, H_UP, W_UP), attn_masks.shape
    assert bool(jnp.all(jnp.isfinite(logits))) and bool(jnp.all(jnp.isfinite(attn_masks)))
    print("KERNEL_OK")
</pallas_src>

<mosaic_0001>
module attributes {stable_mosaic.version = 11 : i64} {
  func.func @action_slot_kernel(%arg0: i32, %arg1: memref<1x16x8xf32, #tpu.memory_space<vmem>>, %arg2: memref<2x16x1xf32, #tpu.memory_space<vmem>>, %arg3: memref<32x16xf32, #tpu.memory_space<vmem>>, %arg4: memref<32x1xf32, #tpu.memory_space<vmem>>, %arg5: memref<8x128xf32, #tpu.memory_space<vmem>>, %arg6: memref<32x128xf32, #tpu.memory_space<vmem>>, %arg7: memref<2x32x32xf32, #tpu.memory_space<vmem>>, %arg8: memref<2x32x1xf32, #tpu.memory_space<vmem>>, %arg9: memref<64x32xf32, #tpu.memory_space<vmem>>, %arg10: memref<64x1xf32, #tpu.memory_space<vmem>>, %arg11: memref<2x32x1xf32, #tpu.memory_space<vmem>>, %arg12: memref<2x32x1xf32, #tpu.memory_space<vmem>>, %arg13: memref<3x32x32xf32, #tpu.memory_space<vmem>>, %arg14: memref<3x1x32xf32, #tpu.memory_space<vmem>>, %arg15: memref<2x1x32xf32, #tpu.memory_space<vmem>>, %arg16: memref<2x1x32xf32, #tpu.memory_space<vmem>>, %arg17: memref<10x32xf32, #tpu.memory_space<vmem>>, %arg18: memref<8x32xf32, #tpu.memory_space<vmem>>, %arg19: memref<1x8xf32, #tpu.memory_space<vmem>>, %arg20: memref<1x1x8xf32, #tpu.memory_space<vmem>>, %arg21: memref<1x10x128xf32, #tpu.memory_space<vmem>>) attributes {dimension_semantics = [#tpu.dimension_semantics<parallel>], iteration_bounds = array<i64: 2>, scalar_prefetch = 0 : i64, scratch_operands = 0 : i64, tpu.core_type = #tpu.core_type<tc>, window_params = [{transform_indices = @transform_0, window_bounds = array<i64: 1, 16, 8>}, {pipeline_mode = #tpu.pipeline_mode<synchronous>, transform_indices = @transform_1, window_bounds = array<i64: 2, 16, 1>}, {pipeline_mode = #tpu.pipeline_mode<synchronous>, transform_indices = @transform_2, window_bounds = array<i64: 32, 16>}, {pipeline_mode = #tpu.pipeline_mode<synchronous>, transform_indices = @transform_3, window_bounds = array<i64: 32, 1>}, {pipeline_mode = #tpu.pipeline_mode<synchronous>, transform_indices = @transform_4, window_bounds = array<i64: 8, 128>}, {pipeline_mode = #tpu.pipeline_mode<synchronous>, transform_indices = @transform_5, window_bounds = array<i64: 32, 128>}, {pipeline_mode = #tpu.pipeline_mode<synchronous>, transform_indices = @transform_6, window_bounds = array<i64: 2, 32, 32>}, {pipeline_mode = #tpu.pipeline_mode<synchronous>, transform_indices = @transform_7, window_bounds = array<i64: 2, 32, 1>}, {pipeline_mode = #tpu.pipeline_mode<synchronous>, transform_indices = @transform_8, window_bounds = array<i64: 64, 32>}, {pipeline_mode = #tpu.pipeline_mode<synchronous>, transform_indices = @transform_9, window_bounds = array<i64: 64, 1>}, {pipeline_mode = #tpu.pipeline_mode<synchronous>, transform_indices = @transform_10, window_bounds = array<i64: 2, 32, 1>}, {pipeline_mode = #tpu.pipeline_mode<synchronous>, transform_indices = @transform_11, window_bounds = array<i64: 2, 32, 1>}, {pipeline_mode = #tpu.pipeline_mode<synchronous>, transform_indices = @transform_12, window_bounds = array<i64: 3, 32, 32>}, {pipeline_mode = #tpu.pipeline_mode<synchronous>, transform_indices = @transform_13, window_bounds = array<i64: 3, 1, 32>}, {pipeline_mode = #tpu.pipeline_mode<synchronous>, transform_indices = @transform_14, window_bounds = array<i64: 2, 1, 32>}, {pipeline_mode = #tpu.pipeline_mode<synchronous>, transform_indices = @transform_15, window_bounds = array<i64: 2, 1, 32>}, {pipeline_mode = #tpu.pipeline_mode<synchronous>, transform_indices = @transform_16, window_bounds = array<i64: 10, 32>}, {pipeline_mode = #tpu.pipeline_mode<synchronous>, transform_indices = @transform_17, window_bounds = array<i64: 8, 32>}, {pipeline_mode = #tpu.pipeline_mode<synchronous>, transform_indices = @transform_18, window_bounds = array<i64: 1, 8>}, {transform_indices = @transform_19, window_bounds = array<i64: 1, 1, 8>}, {transform_indices = @transform_20, window_bounds = array<i64: 1, 10, 128>}]} {
    %c0 = arith.constant 0 : index
    %c0_0 = arith.constant 0 : index
    %c0_1 = arith.constant 0 : index
    %0 = vector.load %arg1[%c0, %c0_0, %c0_1] : memref<1x16x8xf32, #tpu.memory_space<vmem>>, vector<1x16x8xf32>
    %1 = vector.shape_cast %0 : vector<1x16x8xf32> to vector<16x8xf32>
    %cst = arith.constant 0.000000e+00 : f32
    %2 = vector.broadcast %cst : f32 to vector<16x8xf32>
    %3 = arith.maximumf %1, %2 : vector<16x8xf32>
    %c0_2 = arith.constant 0 : index
    %c0_3 = arith.constant 0 : index
    %c0_4 = arith.constant 0 : index
    %4 = vector.load %arg2[%c0_2, %c0_3, %c0_4] : memref<2x16x1xf32, #tpu.memory_space<vmem>>, vector<1x16x1xf32>
    %5 = vector.shape_cast %4 : vector<1x16x1xf32> to vector<16x1xf32>
    %6 = vector.broadcast %5 : vector<16x1xf32> to vector<16x8xf32>
    %7 = arith.mulf %3, %6 : vector<16x8xf32>
    %c1 = arith.constant 1 : index
    %c0_5 = arith.constant 0 : index
    %c0_6 = arith.constant 0 : index
    %8 = vector.load %arg2[%c1, %c0_5, %c0_6] : memref<2x16x1xf32, #tpu.memory_space<vmem>>, vector<1x16x1xf32>
    %9 = vector.shape_cast %8 : vector<1x16x1xf32> to vector<16x1xf32>
    %10 = vector.broadcast %9 : vector<16x1xf32> to vector<16x8xf32>
    %11 = arith.addf %7, %10 : vector<16x8xf32>
    %c0_7 = arith.constant 0 : index
    %c0_8 = arith.constant 0 : index
    %12 = vector.load %arg3[%c0_7, %c0_8] : memref<32x16xf32, #tpu.memory_space<vmem>>, vector<32x16xf32>
    %cst_9 = arith.constant dense<0.000000e+00> : vector<32x8xf32>
    %13 = tpu.matmul %12, %11, %cst_9 {dimension_numbers = #tpu.dot_dimension_numbers<[1], [0], [0], [1], [0, 0, 1, 1], [], []>} : vector<32x16xf32>, vector<16x8xf32>, vector<32x8xf32> -> vector<32x8xf32>
    %c0_10 = arith.constant 0 : index
    %c0_11 = arith.constant 0 : index
    %14 = vector.load %arg4[%c0_10, %c0_11] : memref<32x1xf32, #tpu.memory_space<vmem>>, vector<32x1xf32>
    %15 = vector.broadcast %14 : vector<32x1xf32> to vector<32x8xf32>
    %16 = arith.addf %13, %15 : vector<32x8xf32>
    %cst_12 = arith.constant 0.000000e+00 : f32
    %17 = vector.broadcast %cst_12 : f32 to vector<32x8xf32>
    %18 = arith.maximumf %16, %17 : vector<32x8xf32>
    %c0_13 = arith.constant 0 : index
    %c0_14 = arith.constant 0 : index
    %19 = vector.load %arg5[%c0_13, %c0_14] : memref<8x128xf32, #tpu.memory_space<vmem>>, vector<8x128xf32>
    %cst_15 = arith.constant dense<0.000000e+00> : vector<32x128xf32>
    %20 = tpu.matmul %18, %19, %cst_15 {dimension_numbers = #tpu.dot_dimension_numbers<[1], [0], [0], [1], [0, 0, 1, 1], [], []>} : vector<32x8xf32>, vector<8x128xf32>, vector<32x128xf32> -> vector<32x128xf32>
    %c0_16 = arith.constant 0 : index
    %c0_17 = arith.constant 0 : index
    %21 = vector.load %arg6[%c0_16, %c0_17] : memref<32x128xf32, #tpu.memory_space<vmem>>, vector<32x128xf32>
    %22 = arith.addf %20, %21 : vector<32x128xf32>
    %cst_18 = arith.constant dense<0.000000e+00> : vector<128xf32>
    %23 = vector.multi_reduction <add>, %22, %cst_18 [0] : vector<32x128xf32> to vector<128xf32>
    %24 = vector.shape_cast %23 : vector<128xf32> to vector<1x128xf32>
    %cst_19 = arith.constant 3.200000e+01 : f32
    %25 = vector.broadcast %cst_19 : f32 to vector<1x128xf32>
    %26 = arith.divf %24, %25 : vector<1x128xf32>
    %27 = vector.broadcast %26 : vector<1x128xf32> to vector<32x128xf32>
    %28 = arith.subf %22, %27 : vector<32x128xf32>
    %29 = arith.mulf %28, %28 : vector<32x128xf32>
    %cst_20 = arith.constant dense<0.000000e+00> : vector<128xf32>
    %30 = vector.multi_reduction <add>, %29, %cst_20 [0] : vector<32x128xf32> to vector<128xf32>
    %31 = vector.shape_cast %30 : vector<128xf32> to vector<1x128xf32>
    %cst_21 = arith.constant 3.200000e+01 : f32
    %32 = vector.broadcast %cst_21 : f32 to vector<1x128xf32>
    %33 = arith.divf %31, %32 : vector<1x128xf32>
    %34 = vector.broadcast %26 : vector<1x128xf32> to vector<32x128xf32>
    %35 = arith.subf %22, %34 : vector<32x128xf32>
    %cst_22 = arith.constant 9.99999974E-6 : f32
    %36 = vector.broadcast %cst_22 : f32 to vector<1x128xf32>
    %37 = arith.addf %33, %36 : vector<1x128xf32>
    %38 = math.rsqrt %37 : vector<1x128xf32>
    %39 = vector.broadcast %38 : vector<1x128xf32> to vector<32x128xf32>
    %40 = arith.mulf %35, %39 : vector<32x128xf32>
    %c0_23 = arith.constant 0 : index
    %c0_24 = arith.constant 0 : index
    %c0_25 = arith.constant 0 : index
    %41 = vector.load %arg11[%c0_23, %c0_24, %c0_25] : memref<2x32x1xf32, #tpu.memory_space<vmem>>, vector<1x32x1xf32>
    %42 = vector.shape_cast %41 : vector<1x32x1xf32> to vector<32x1xf32>
    %43 = vector.broadcast %42 : vector<32x1xf32> to vector<32x128xf32>
    %44 = arith.mulf %40, %43 : vector<32x128xf32>
    %c0_26 = arith.constant 0 : index
    %c0_27 = arith.constant 0 : index
    %c0_28 = arith.constant 0 : index
    %45 = vector.load %arg12[%c0_26, %c0_27, %c0_28] : memref<2x32x1xf32, #tpu.memory_space<vmem>>, vector<1x32x1xf32>
    %46 = vector.shape_cast %45 : vector<1x32x1xf32> to vector<32x1xf32>
    %47 = vector.broadcast %46 : vector<32x1xf32> to vector<32x128xf32>
    %48 = arith.addf %44, %47 : vector<32x128xf32>
    %c0_29 = arith.constant 0 : index
    %c0_30 = arith.constant 0 : index
    %c0_31 = arith.constant 0 : index
    %49 = vector.load %arg7[%c0_29, %c0_30, %c0_31] : memref<2x32x32xf32, #tpu.memory_space<vmem>>, vector<1x32x32xf32>
    %50 = vector.shape_cast %49 : vector<1x32x32xf32> to vector<32x32xf32>
    %cst_32 = arith.constant dense<0.000000e+00> : vector<32x128xf32>
    %51 = tpu.matmul %50, %48, %cst_32 {dimension_numbers = #tpu.dot_dimension_numbers<[1], [0], [0], [1], [0, 0, 1, 1], [], []>} : vector<32x32xf32>, vector<32x128xf32>, vector<32x128xf32> -> vector<32x128xf32>
    %c0_33 = arith.constant 0 : index
    %c0_34 = arith.constant 0 : index
    %c0_35 = arith.constant 0 : index
    %52 = vector.load %arg8[%c0_33, %c0_34, %c0_35] : memref<2x32x1xf32, #tpu.memory_space<vmem>>, vector<1x32x1xf32>
    %53 = vector.shape_cast %52 : vector<1x32x1xf32> to vector<32x1xf32>
    %54 = vector.broadcast %53 : vector<32x1xf32> to vector<32x128xf32>
    %55 = arith.addf %51, %54 : vector<32x128xf32>
    %cst_36 = arith.constant 0.000000e+00 : f32
    %56 = vector.broadcast %cst_36 : f32 to vector<32x128xf32>
    %57 = arith.maximumf %55, %56 : vector<32x128xf32>
    %c1_37 = arith.constant 1 : index
    %c0_38 = arith.constant 0 : index
    %c0_39 = arith.constant 0 : index
    %58 = vector.load %arg7[%c1_37, %c0_38, %c0_39] : memref<2x32x32xf32, #tpu.memory_space<vmem>>, vector<1x32x32xf32>
    %59 = vector.shape_cast %58 : vector<1x32x32xf32> to vector<32x32xf32>
    %cst_40 = arith.constant dense<0.000000e+00> : vector<32x128xf32>
    %60 = tpu.matmul %59, %57, %cst_40 {dimension_numbers = #tpu.dot_dimension_numbers<[1], [0], [0], [1], [0, 0, 1, 1], [], []>} : vector<32x32xf32>, vector<32x128xf32>, vector<32x128xf32> -> vector<32x128xf32>
    %c1_41 = arith.constant 1 : index
    %c0_42 = arith.constant 0 : index
    %c0_43 = arith.constant 0 : index
    %61 = vector.load %arg8[%c1_41, %c0_42, %c0_43] : memref<2x32x1xf32, #tpu.memory_space<vmem>>, vector<1x32x1xf32>
    %62 = vector.shape_cast %61 : vector<1x32x1xf32> to vector<32x1xf32>
    %63 = vector.broadcast %62 : vector<32x1xf32> to vector<32x128xf32>
    %64 = arith.addf %60, %63 : vector<32x128xf32>
    %cst_44 = arith.constant dense<0.000000e+00> : vector<128xf32>
    %65 = vector.multi_reduction <add>, %64, %cst_44 [0] : vector<32x128xf32> to vector<128xf32>
    %66 = vector.shape_cast %65 : vector<128xf32> to vector<1x128xf32>
    %cst_45 = arith.constant 3.200000e+01 : f32
    %67 = vector.broadcast %cst_45 : f32 to vector<1x128xf32>
    %68 = arith.divf %66, %67 : vector<1x128xf32>
    %69 = vector.broadcast %68 : vector<1x128xf32> to vector<32x128xf32>
    %70 = arith.subf %64, %69 : vector<32x128xf32>
    %71 = arith.mulf %70, %70 : vector<32x128xf32>
    %cst_46 = arith.constant dense<0.000000e+00> : vector<128xf32>
    %72 = vector.multi_reduction <add>, %71, %cst_46 [0] : vector<32x128xf32> to vector<128xf32>
    %73 = vector.shape_cast %72 : vector<128xf32> to vector<1x128xf32>
    %cst_47 = arith.constant 3.200000e+01 : f32
    %74 = vector.broadcast %cst_47 : f32 to vector<1x128xf32>
    %75 = arith.divf %73, %74 : vector<1x128xf32>
    %76 = vector.broadcast %68 : vector<1x128xf32> to vector<32x128xf32>
    %77 = arith.subf %64, %76 : vector<32x128xf32>
    %cst_48 = arith.constant 9.99999974E-6 : f32
    %78 = vector.broadcast %cst_48 : f32 to vector<1x128xf32>
    %79 = arith.addf %75, %78 : vector<1x128xf32>
    %80 = math.rsqrt %79 : vector<1x128xf32>
    %81 = vector.broadcast %80 : vector<1x128xf32> to vector<32x128xf32>
    %82 = arith.mulf %77, %81 : vector<32x128xf32>
    %c1_49 = arith.constant 1 : index
    %c0_50 = arith.constant 0 : index
    %c0_51 = arith.constant 0 : index
    %83 = vector.load %arg11[%c1_49, %c0_50, %c0_51] : memref<2x32x1xf32, #tpu.memory_space<vmem>>, vector<1x32x1xf32>
    %84 = vector.shape_cast %83 : vector<1x32x1xf32> to vector<32x1xf32>
    %85 = vector.broadcast %84 : vector<32x1xf32> to vector<32x128xf32>
    %86 = arith.mulf %82, %85 : vector<32x128xf32>
    %c1_52 = arith.constant 1 : index
    %c0_53 = arith.constant 0 : index
    %c0_54 = arith.constant 0 : index
    %87 = vector.load %arg12[%c1_52, %c0_53, %c0_54] : memref<2x32x1xf32, #tpu.memory_space<vmem>>, vector<1x32x1xf32>
    %88 = vector.shape_cast %87 : vector<1x32x1xf32> to vector<32x1xf32>
    %89 = vector.broadcast %88 : vector<32x1xf32> to vector<32x128xf32>
    %90 = arith.addf %86, %89 : vector<32x128xf32>
    %c0_55 = arith.constant 0 : index
    %c0_56 = arith.constant 0 : index
    %91 = vector.load %arg9[%c0_55, %c0_56] : memref<64x32xf32, #tpu.memory_space<vmem>>, vector<64x32xf32>
    %cst_57 = arith.constant dense<0.000000e+00> : vector<64x128xf32>
    %92 = tpu.matmul %91, %90, %cst_57 {dimension_numbers = #tpu.dot_dimension_numbers<[1], [0], [0], [1], [0, 0, 1, 1], [], []>} : vector<64x32xf32>, vector<32x128xf32>, vector<64x128xf32> -> vector<64x128xf32>
    %c0_58 = arith.constant 0 : index
    %c0_59 = arith.constant 0 : index
    %93 = vector.load %arg10[%c0_58, %c0_59] : memref<64x1xf32, #tpu.memory_space<vmem>>, vector<64x1xf32>
    %94 = vector.broadcast %93 : vector<64x1xf32> to vector<64x128xf32>
    %95 = arith.addf %92, %94 : vector<64x128xf32>
    %96 = vector.extract_strided_slice %95 {offsets = [0, 0], sizes = [32, 128], strides = [1, 1]} : vector<64x128xf32> to vector<32x128xf32>
    %97 = vector.extract_strided_slice %95 {offsets = [32, 0], sizes = [32, 128], strides = [1, 1]} : vector<64x128xf32> to vector<32x128xf32>
    %c0_60 = arith.constant 0 : index
    %c0_61 = arith.constant 0 : index
    %98 = vector.load %arg17[%c0_60, %c0_61] : memref<10x32xf32, #tpu.memory_space<vmem>>, vector<10x32xf32>
    %cst_62 = arith.constant dense<0.000000e+00> : vector<10xf32>
    %99 = vector.multi_reduction <add>, %98, %cst_62 [1] : vector<10x32xf32> to vector<10xf32>
    %100 = vector.shape_cast %99 : vector<10xf32> to vector<10x1xf32>
    %cst_63 = arith.constant 3.200000e+01 : f32
    %101 = vector.broadcast %cst_63 : f32 to vector<10x1xf32>
    %102 = arith.divf %100, %101 : vector<10x1xf32>
    %103 = vector.broadcast %102 : vector<10x1xf32> to vector<10x32xf32>
    %104 = arith.subf %98, %103 : vector<10x32xf32>
    %105 = arith.mulf %104, %104 : vector<10x32xf32>
    %cst_64 = arith.constant dense<0.000000e+00> : vector<10xf32>
    %106 = vector.multi_reduction <add>, %105, %cst_64 [1] : vector<10x32xf32> to vector<10xf32>
    %107 = vector.shape_cast %106 : vector<10xf32> to vector<10x1xf32>
    %cst_65 = arith.constant 3.200000e+01 : f32
    %108 = vector.broadcast %cst_65 : f32 to vector<10x1xf32>
    %109 = arith.divf %107, %108 : vector<10x1xf32>
    %110 = vector.broadcast %102 : vector<10x1xf32> to vector<10x32xf32>
    %111 = arith.subf %98, %110 : vector<10x32xf32>
    %cst_66 = arith.constant 9.99999974E-6 : f32
    %112 = vector.broadcast %cst_66 : f32 to vector<10x1xf32>
    %113 = arith.addf %109, %112 : vector<10x1xf32>
    %114 = math.rsqrt %113 : vector<10x1xf32>
    %115 = vector.broadcast %114 : vector<10x1xf32> to vector<10x32xf32>
    %116 = arith.mulf %111, %115 : vector<10x32xf32>
    %c0_67 = arith.constant 0 : index
    %c0_68 = arith.constant 0 : index
    %c0_69 = arith.constant 0 : index
    %117 = vector.load %arg15[%c0_67, %c0_68, %c0_69] : memref<2x1x32xf32, #tpu.memory_space<vmem>>, vector<1x1x32xf32>
    %118 = vector.shape_cast %117 : vector<1x1x32xf32> to vector<1x32xf32>
    %119 = vector.broadcast %118 : vector<1x32xf32> to vector<10x32xf32>
    %120 = arith.mulf %116, %119 : vector<10x32xf32>
    %c0_70 = arith.constant 0 : index
    %c0_71 = arith.constant 0 : index
    %c0_72 = arith.constant 0 : index
    %121 = vector.load %arg16[%c0_70, %c0_71, %c0_72] : memref<2x1x32xf32, #tpu.memory_space<vmem>>, vector<1x1x32xf32>
    %122 = vector.shape_cast %121 : vector<1x1x32xf32> to vector<1x32xf32>
    %123 = vector.broadcast %122 : vector<1x32xf32> to vector<10x32xf32>
    %124 = arith.addf %120, %123 : vector<10x32xf32>
    %c0_73 = arith.constant 0 : index
    %c0_74 = arith.constant 0 : index
    %c0_75 = arith.constant 0 : index
    %125 = vector.load %arg13[%c0_73, %c0_74, %c0_75] : memref<3x32x32xf32, #tpu.memory_space<vmem>>, vector<1x32x32xf32>
    %126 = vector.shape_cast %125 : vector<1x32x32xf32> to vector<32x32xf32>
    %cst_76 = arith.constant dense<0.000000e+00> : vector<10x32xf32>
    %127 = tpu.matmul %124, %126, %cst_76 {dimension_numbers = #tpu.dot_dimension_numbers<[1], [0], [0], [1], [0, 0, 1, 1], [], []>} : vector<10x32xf32>, vector<32x32xf32>, vector<10x32xf32> -> vector<10x32xf32>
    %c0_77 = arith.constant 0 : index
    %c0_78 = arith.constant 0 : index
    %c0_79 = arith.constant 0 : index
    %128 = vector.load %arg14[%c0_77, %c0_78, %c0_79] : memref<3x1x32xf32, #tpu.memory_space<vmem>>, vector<1x1x32xf32>
    %129 = vector.shape_cast %128 : vector<1x1x32xf32> to vector<1x32xf32>
    %130 = vector.broadcast %129 : vector<1x32xf32> to vector<10x32xf32>
    %131 = arith.addf %127, %130 : vector<10x32xf32>
    %cst_80 = arith.constant dense<0.000000e+00> : vector<10x128xf32>
    %132 = tpu.matmul %131, %96, %cst_80 {dimension_numbers = #tpu.dot_dimension_numbers<[1], [0], [0], [1], [0, 0, 1, 1], [], []>} : vector<10x32xf32>, vector<32x128xf32>, vector<10x128xf32> -> vector<10x128xf32>
    %cst_81 = arith.constant 0.176776692 : f32
    %133 = vector.broadcast %cst_81 : f32 to vector<10x128xf32>
    %134 = arith.mulf %132, %133 : vector<10x128xf32>
    %cst_82 = arith.constant dense<0xFF800000> : vector<128xf32>
    %135 = vector.multi_reduction <maximumf>, %134, %cst_82 [0] : vector<10x128xf32> to vector<128xf32>
    %136 = vector.shape_cast %135 : vector<128xf32> to vector<1x128xf32>
    %137 = vector.broadcast %136 : vector<1x128xf32> to vector<10x128xf32>
    %138 = arith.subf %134, %137 : vector<10x128xf32>
    %139 = math.exp %138 : vector<10x128xf32>
    %cst_83 = arith.constant dense<0.000000e+00> : vector<128xf32>
    %140 = vector.multi_reduction <add>, %139, %cst_83 [0] : vector<10x128xf32> to vector<128xf32>
    %141 = vector.shape_cast %140 : vector<128xf32> to vector<1x128xf32>
    %142 = tpu.reciprocal %141 {approx = true} : vector<1x128xf32> -> vector<1x128xf32>
    %143 = vector.broadcast %142 : vector<1x128xf32> to vector<10x128xf32>
    %144 = arith.mulf %139, %143 : vector<10x128xf32>
    %cst_84 = arith.constant 9.99999993E-9 : f32
    %145 = vector.broadcast %cst_84 : f32 to vector<10x128xf32>
    %146 = arith.addf %144, %145 : vector<10x128xf32>
    %c0_85 = arith.constant 0 : index
    %c0_86 = arith.constant 0 : index
    %c0_87 = arith.constant 0 : index
    %147 = vector.load %arg21[%c0_85, %c0_86, %c0_87] : memref<1x10x128xf32, #tpu.memory_space<vmem>>, vector<1x10x128xf32>
    %148 = vector.shape_cast %147 : vector<1x10x128xf32> to vector<10x128xf32>
    %149 = vector.shape_cast %146 : vector<10x128xf32> to vector<1x10x128xf32>
    tpu.vector_store %arg21[%c0_85, %c0_86, %c0_87], %149 {strides = array<i32>} : memref<1x10x128xf32, #tpu.memory_space<vmem>>, vector<1x10x128xf32>,
    %cst_88 = arith.constant dense<0.000000e+00> : vector<10xf32>
    %150 = vector.multi_reduction <add>, %146, %cst_88 [1] : vector<10x128xf32> to vector<10xf32>
    %151 = vector.shape_cast %150 : vector<10xf32> to vector<10x1xf32>
    %152 = tpu.reciprocal %151 {approx = true} : vector<10x1xf32> -> vector<10x1xf32>
    %153 = vector.broadcast %152 : vector<10x1xf32> to vector<10x128xf32>
    %154 = arith.mulf %146, %153 : vector<10x128xf32>
    %cst_89 = arith.constant dense<0.000000e+00> : vector<10x32xf32>
    %155 = tpu.matmul %154, %97, %cst_89 {dimension_numbers = #tpu.dot_dimension_numbers<[1], [1], [0], [0], [0, 0, 1, 0], [], []>} : vector<10x128xf32>, vector<32x128xf32>, vector<10x32xf32> -> vector<10x32xf32>
    %156 = vector.extract_strided_slice %155 {offsets = [0, 0], sizes = [8, 32], strides = [1, 1]} : vector<10x32xf32> to vector<8x32xf32>
    %cst_90 = arith.constant dense<0.000000e+00> : vector<8xf32>
    %157 = vector.multi_reduction <add>, %156, %cst_90 [1] : vector<8x32xf32> to vector<8xf32>
    %158 = vector.shape_cast %157 : vector<8xf32> to vector<8x1xf32>
    %cst_91 = arith.constant 3.200000e+01 : f32
    %159 = vector.broadcast %cst_91 : f32 to vector<8x1xf32>
    %160 = arith.divf %158, %159 : vector<8x1xf32>
    %161 = vector.broadcast %160 : vector<8x1xf32> to vector<8x32xf32>
    %162 = arith.subf %156, %161 : vector<8x32xf32>
    %163 = arith.mulf %162, %162 : vector<8x32xf32>
    %cst_92 = arith.constant dense<0.000000e+00> : vector<8xf32>
    %164 = vector.multi_reduction <add>, %163, %cst_92 [1] : vector<8x32xf32> to vector<8xf32>
    %165 = vector.shape_cast %164 : vector<8xf32> to vector<8x1xf32>
    %cst_93 = arith.constant 3.200000e+01 : f32
    %166 = vector.broadcast %cst_93 : f32 to vector<8x1xf32>
    %167 = arith.divf %165, %166 : vector<8x1xf32>
    %168 = vector.broadcast %160 : vector<8x1xf32> to vector<8x32xf32>
    %169 = arith.subf %156, %168 : vector<8x32xf32>
    %cst_94 = arith.constant 9.99999974E-6 : f32
    %170 = vector.broadcast %cst_94 : f32 to vector<8x1xf32>
    %171 = arith.addf %167, %170 : vector<8x1xf32>
    %172 = math.rsqrt %171 : vector<8x1xf32>
    %173 = vector.broadcast %172 : vector<8x1xf32> to vector<8x32xf32>
    %174 = arith.mulf %169, %173 : vector<8x32xf32>
    %c1_95 = arith.constant 1 : index
    %c0_96 = arith.constant 0 : index
    %c0_97 = arith.constant 0 : index
    %175 = vector.load %arg15[%c1_95, %c0_96, %c0_97] : memref<2x1x32xf32, #tpu.memory_space<vmem>>, vector<1x1x32xf32>
    %176 = vector.shape_cast %175 : vector<1x1x32xf32> to vector<1x32xf32>
    %177 = vector.broadcast %176 : vector<1x32xf32> to vector<8x32xf32>
    %178 = arith.mulf %174, %177 : vector<8x32xf32>
    %c1_98 = arith.constant 1 : index
    %c0_99 = arith.constant 0 : index
    %c0_100 = arith.constant 0 : index
    %179 = vector.load %arg16[%c1_98, %c0_99, %c0_100] : memref<2x1x32xf32, #tpu.memory_space<vmem>>, vector<1x1x32xf32>
    %180 = vector.shape_cast %179 : vector<1x1x32xf32> to vector<1x32xf32>
    %181 = vector.broadcast %180 : vector<1x32xf32> to vector<8x32xf32>
    %182 = arith.addf %178, %181 : vector<8x32xf32>
    %c1_101 = arith.constant 1 : index
    %c0_102 = arith.constant 0 : index
    %c0_103 = arith.constant 0 : index
    %183 = vector.load %arg13[%c1_101, %c0_102, %c0_103] : memref<3x32x32xf32, #tpu.memory_space<vmem>>, vector<1x32x32xf32>
    %184 = vector.shape_cast %183 : vector<1x32x32xf32> to vector<32x32xf32>
    %cst_104 = arith.constant dense<0.000000e+00> : vector<8x32xf32>
    %185 = tpu.matmul %182, %184, %cst_104 {dimension_numbers = #tpu.dot_dimension_numbers<[1], [0], [0], [1], [0, 0, 1, 1], [], []>} : vector<8x32xf32>, vector<32x32xf32>, vector<8x32xf32> -> vector<8x32xf32>
    %c1_105 = arith.constant 1 : index
    %c0_106 = arith.constant 0 : index
    %c0_107 = arith.constant 0 : index
    %186 = vector.load %arg14[%c1_105, %c0_106, %c0_107] : memref<3x1x32xf32, #tpu.memory_space<vmem>>, vector<1x1x32xf32>
    %187 = vector.shape_cast %186 : vector<1x1x32xf32> to vector<1x32xf32>
    %188 = vector.broadcast %187 : vector<1x32xf32> to vector<8x32xf32>
    %189 = arith.addf %185, %188 : vector<8x32xf32>
    %cst_108 = arith.constant 0.000000e+00 : f32
    %190 = vector.broadcast %cst_108 : f32 to vector<8x32xf32>
    %191 = arith.maximumf %189, %190 : vector<8x32xf32>
    %c2 = arith.constant 2 : index
    %c0_109 = arith.constant 0 : index
    %c0_110 = arith.constant 0 : index
    %192 = vector.load %arg13[%c2, %c0_109, %c0_110] : memref<3x32x32xf32, #tpu.memory_space<vmem>>, vector<1x32x32xf32>
    %193 = vector.shape_cast %192 : vector<1x32x32xf32> to vector<32x32xf32>
    %cst_111 = arith.constant dense<0.000000e+00> : vector<8x32xf32>
    %194 = tpu.matmul %191, %193, %cst_111 {dimension_numbers = #tpu.dot_dimension_numbers<[1], [0], [0], [1], [0, 0, 1, 1], [], []>} : vector<8x32xf32>, vector<32x32xf32>, vector<8x32xf32> -> vector<8x32xf32>
    %c2_112 = arith.constant 2 : index
    %c0_113 = arith.constant 0 : index
    %c0_114 = arith.constant 0 : index
    %195 = vector.load %arg14[%c2_112, %c0_113, %c0_114] : memref<3x1x32xf32, #tpu.memory_space<vmem>>, vector<1x1x32xf32>
    %196 = vector.shape_cast %195 : vector<1x1x32xf32> to vector<1x32xf32>
    %197 = vector.broadcast %196 : vector<1x32xf32> to vector<8x32xf32>
    %198 = arith.addf %194, %197 : vector<8x32xf32>
    %199 = arith.addf %156, %198 : vector<8x32xf32>
    %c0_115 = arith.constant 0 : index
    %c0_116 = arith.constant 0 : index
    %200 = vector.load %arg18[%c0_115, %c0_116] : memref<8x32xf32, #tpu.memory_space<vmem>>, vector<8x32xf32>
    %201 = arith.mulf %199, %200 : vector<8x32xf32>
    %cst_117 = arith.constant dense<0.000000e+00> : vector<8xf32>
    %202 = vector.multi_reduction <add>, %201, %cst_117 [1] : vector<8x32xf32> to vector<8xf32>
    %203 = vector.shape_cast %202 : vector<8xf32> to vector<1x1x8xf32>
    %c0_118 = arith.constant 0 : index
    %c0_119 = arith.constant 0 : index
    %204 = vector.load %arg19[%c0_118, %c0_119] : memref<1x8xf32, #tpu.memory_space<vmem>>, vector<1x8xf32>
    %205 = vector.shape_cast %204 : vector<1x8xf32> to vector<1x1x8xf32>
    %206 = arith.addf %203, %205 : vector<1x1x8xf32>
    %c0_120 = arith.constant 0 : index
    %c0_121 = arith.constant 0 : index
    %c0_122 = arith.constant 0 : index
    %207 = vector.load %arg20[%c0_120, %c0_121, %c0_122] : memref<1x1x8xf32, #tpu.memory_space<vmem>>, vector<1x1x8xf32>
    tpu.vector_store %arg20[%c0_120, %c0_121, %c0_122], %206 {strides = array<i32>} : memref<1x1x8xf32, #tpu.memory_space<vmem>>, vector<1x1x8xf32>,
    return
  }
  func.func @transform_0(%arg0: i32) -> (i32, i32, i32) {
    %c0_i32 = arith.constant 0 : i32
    %c0_i32_0 = arith.constant 0 : i32
    %c0_i32_1 = arith.constant 0 : i32
    return %arg0, %c0_i32, %c0_i32_0 : i32, i32, i32
  }
  func.func @transform_1(%arg0: i32) -> (i32, i32, i32) {
    %c0_i32 = arith.constant 0 : i32
    %c0_i32_0 = arith.constant 0 : i32
    %c0_i32_1 = arith.constant 0 : i32
    %c0_i32_2 = arith.constant 0 : i32
    return %c0_i32, %c0_i32_0, %c0_i32_1 : i32, i32, i32
  }
  func.func @transform_2(%arg0: i32) -> (i32, i32) {
    %c0_i32 = arith.constant 0 : i32
    %c0_i32_0 = arith.constant 0 : i32
    %c0_i32_1 = arith.constant 0 : i32
    return %c0_i32, %c0_i32_0 : i32, i32
  }
  func.func @transform_3(%arg0: i32) -> (i32, i32) {
    %c0_i32 = arith.constant 0 : i32
    %c0_i32_0 = arith.constant 0 : i32
    %c0_i32_1 = arith.constant 0 : i32
    return %c0_i32, %c0_i32_0 : i32, i32
  }
  func.func @transform_4(%arg0: i32) -> (i32, i32) {
    %c0_i32 = arith.constant 0 : i32
    %c0_i32_0 = arith.constant 0 : i32
    %c0_i32_1 = arith.constant 0 : i32
    return %c0_i32, %c0_i32_0 : i32, i32
  }
  func.func @transform_5(%arg0: i32) -> (i32, i32) {
    %c0_i32 = arith.constant 0 : i32
    %c0_i32_0 = arith.constant 0 : i32
    %c0_i32_1 = arith.constant 0 : i32
    return %c0_i32, %c0_i32_0 : i32, i32
  }
  func.func @transform_6(%arg0: i32) -> (i32, i32, i32) {
    %c0_i32 = arith.constant 0 : i32
    %c0_i32_0 = arith.constant 0 : i32
    %c0_i32_1 = arith.constant 0 : i32
    %c0_i32_2 = arith.constant 0 : i32
    return %c0_i32, %c0_i32_0, %c0_i32_1 : i32, i32, i32
  }
  func.func @transform_7(%arg0: i32) -> (i32, i32, i32) {
    %c0_i32 = arith.constant 0 : i32
    %c0_i32_0 = arith.constant 0 : i32
    %c0_i32_1 = arith.constant 0 : i32
    %c0_i32_2 = arith.constant 0 : i32
    return %c0_i32, %c0_i32_0, %c0_i32_1 : i32, i32, i32
  }
  func.func @transform_8(%arg0: i32) -> (i32, i32) {
    %c0_i32 = arith.constant 0 : i32
    %c0_i32_0 = arith.constant 0 : i32
    %c0_i32_1 = arith.constant 0 : i32
    return %c0_i32, %c0_i32_0 : i32, i32
  }
  func.func @transform_9(%arg0: i32) -> (i32, i32) {
    %c0_i32 = arith.constant 0 : i32
    %c0_i32_0 = arith.constant 0 : i32
    %c0_i32_1 = arith.constant 0 : i32
    return %c0_i32, %c0_i32_0 : i32, i32
  }
  func.func @transform_10(%arg0: i32) -> (i32, i32, i32) {
    %c0_i32 = arith.constant 0 : i32
    %c0_i32_0 = arith.constant 0 : i32
    %c0_i32_1 = arith.constant 0 : i32
    %c0_i32_2 = arith.constant 0 : i32
    return %c0_i32, %c0_i32_0, %c0_i32_1 : i32, i32, i32
  }
  func.func @transform_11(%arg0: i32) -> (i32, i32, i32) {
    %c0_i32 = arith.constant 0 : i32
    %c0_i32_0 = arith.constant 0 : i32
    %c0_i32_1 = arith.constant 0 : i32
    %c0_i32_2 = arith.constant 0 : i32
    return %c0_i32, %c0_i32_0, %c0_i32_1 : i32, i32, i32
  }
  func.func @transform_12(%arg0: i32) -> (i32, i32, i32) {
    %c0_i32 = arith.constant 0 : i32
    %c0_i32_0 = arith.constant 0 : i32
    %c0_i32_1 = arith.constant 0 : i32
    %c0_i32_2 = arith.constant 0 : i32
    return %c0_i32, %c0_i32_0, %c0_i32_1 : i32, i32, i32
  }
  func.func @transform_13(%arg0: i32) -> (i32, i32, i32) {
    %c0_i32 = arith.constant 0 : i32
    %c0_i32_0 = arith.constant 0 : i32
    %c0_i32_1 = arith.constant 0 : i32
    %c0_i32_2 = arith.constant 0 : i32
    return %c0_i32, %c0_i32_0, %c0_i32_1 : i32, i32, i32
  }
  func.func @transform_14(%arg0: i32) -> (i32, i32, i32) {
    %c0_i32 = arith.constant 0 : i32
    %c0_i32_0 = arith.constant 0 : i32
    %c0_i32_1 = arith.constant 0 : i32
    %c0_i32_2 = arith.constant 0 : i32
    return %c0_i32, %c0_i32_0, %c0_i32_1 : i32, i32, i32
  }
  func.func @transform_15(%arg0: i32) -> (i32, i32, i32) {
    %c0_i32 = arith.constant 0 : i32
    %c0_i32_0 = arith.constant 0 : i32
    %c0_i32_1 = arith.constant 0 : i32
    %c0_i32_2 = arith.constant 0 : i32
    return %c0_i32, %c0_i32_0, %c0_i32_1 : i32, i32, i32
  }
  func.func @transform_16(%arg0: i32) -> (i32, i32) {
    %c0_i32 = arith.constant 0 : i32
    %c0_i32_0 = arith.constant 0 : i32
    %c0_i32_1 = arith.constant 0 : i32
    return %c0_i32, %c0_i32_0 : i32, i32
  }
  func.func @transform_17(%arg0: i32) -> (i32, i32) {
    %c0_i32 = arith.constant 0 : i32
    %c0_i32_0 = arith.constant 0 : i32
    %c0_i32_1 = arith.constant 0 : i32
    return %c0_i32, %c0_i32_0 : i32, i32
  }
  func.func @transform_18(%arg0: i32) -> (i32, i32) {
    %c0_i32 = arith.constant 0 : i32
    %c0_i32_0 = arith.constant 0 : i32
    %c0_i32_1 = arith.constant 0 : i32
    return %c0_i32, %c0_i32_0 : i32, i32
  }
  func.func @transform_19(%arg0: i32) -> (i32, i32, i32) {
    %c0_i32 = arith.constant 0 : i32
    %c0_i32_0 = arith.constant 0 : i32
    %c0_i32_1 = arith.constant 0 : i32
    return %arg0, %c0_i32, %c0_i32_0 : i32, i32, i32
  }
  func.func @transform_20(%arg0: i32) -> (i32, i32, i32) {
    %c0_i32 = arith.constant 0 : i32
    %c0_i32_0 = arith.constant 0 : i32
    %c0_i32_1 = arith.constant 0 : i32
    return %arg0, %c0_i32, %c0_i32_0 : i32, i32, i32
  }
}

</mosaic_0001>

<llo_original>
// kernel: action_slot_forward.1
$region0: #{action_slot_forward.1}
  #allocation0 [shape = 'u32[]', space=smem, size = 0x4, offset = 0x4, fixed_abs, tag = 'smem constant byte address 0x4 - core index']
  #allocation1 [shape = 'u32[144,128]{1,0:T(1,128)}', space=vmem, size = 0x12000, scoped, tag = 'internal scratch']
  %s0 = inlined_call_operand.vmem [shape: f32[2,16,8], index: 0, kind: input, shape index: {}]
  %s1 = inlined_call_operand.vmem [shape: f32[2,16,1], index: 1, kind: input, shape index: {}]
  %s2 = inlined_call_operand.vmem [shape: f32[32,16], index: 2, kind: input, shape index: {}]
  %s3 = inlined_call_operand.vmem [shape: f32[32,1], index: 3, kind: input, shape index: {}]
  %s4 = inlined_call_operand.vmem [shape: f32[8,128], index: 4, kind: input, shape index: {}]
  %s5 = inlined_call_operand.vmem [shape: f32[32,128], index: 5, kind: input, shape index: {}]
  %s6 = inlined_call_operand.vmem [shape: f32[2,32,32], index: 6, kind: input, shape index: {}]
  %s7 = inlined_call_operand.vmem [shape: f32[2,32,1], index: 7, kind: input, shape index: {}]
  %s8 = inlined_call_operand.vmem [shape: f32[64,32], index: 8, kind: input, shape index: {}]
  %s9 = inlined_call_operand.vmem [shape: f32[64,1], index: 9, kind: input, shape index: {}]
  %s10 = inlined_call_operand.vmem [shape: f32[2,32,1], index: 10, kind: input, shape index: {}]
  %s11 = inlined_call_operand.vmem [shape: f32[2,32,1], index: 11, kind: input, shape index: {}]
  %s12 = inlined_call_operand.vmem [shape: f32[3,32,32], index: 12, kind: input, shape index: {}]
  %s13 = inlined_call_operand.vmem [shape: f32[3,1,32], index: 13, kind: input, shape index: {}]
  %s14 = inlined_call_operand.vmem [shape: f32[2,1,32], index: 14, kind: input, shape index: {}]
  %s15 = inlined_call_operand.vmem [shape: f32[2,1,32], index: 15, kind: input, shape index: {}]
  %s16 = inlined_call_operand.vmem [shape: f32[10,32], index: 16, kind: input, shape index: {}]
  %s17 = inlined_call_operand.vmem [shape: f32[8,32], index: 17, kind: input, shape index: {}]
  %s18 = inlined_call_operand.vmem [shape: f32[1,8], index: 18, kind: input, shape index: {}]
  %s19 = inlined_call_operand.hbm [shape: f32[2,1,8], index: 19, kind: output, shape index: {0}]
  %s20 = inlined_call_operand.vmem [shape: f32[2,10,128], index: 20, kind: output, shape index: {1}]
  %21 = xla_tuple %s19, %s20
  %s22 = sld [smem:[#allocation0]]
  $region117: #{action_slot_forward.1} parent=0
    _
  %s24 = ssub.s32 1, %s22
  %s25 = scalar_select 0, %s24, %s22
  $region1: #{action_slot_forward.1} parent=0
    #allocation2 [shape = 'u8[1024]{0}', space=vmem, size = 0x400, scoped, tag = 'output window, operand 0']
    #allocation3 [shape = 's32[2]{0}', space=sflag, size = 0x8, scoped, tag = 'scoped memory for action_slot_forward.1']
    %26 = vsyncpa [#allocation3], 0
    %s27 = scalar_lea.sflag [#allocation3], 1
    %28 = vsyncpa %s27, 0
    loop: start=0, step=1, limit=4
    $region2: #{action_slot_forward.1} parent=1 // loop_pre_header
      _
    $region3: #{action_slot_forward.1} parent=1 // loop_header
      %s30 = sphi 0, %s34
      %p31 = scmp.ge.s32.totalorder %s30, 4
      %s40 = sphi 0, %s42
      %s43 = sphi 0, %s40
      %s44 = sphi 0, %s43
      %s60 = sphi 0, %s44
      %s64 = sphi 0, %s64
      %s66 = sphi 0, %s64
      %s67 = sphi 0, %s66
      %s81 = sphi 0, %s67
      %s85 = sphi 0, %s85
      %s87 = sphi 0, %s85
      %s88 = sphi 0, %s87
      %s102 = sphi 0, %s88
      %s106 = sphi 0, %s106
      %s108 = sphi 0, %s106
      %s109 = sphi 0, %s108
      %s123 = sphi 0, %s109
      %s127 = sphi 0, %s127
      %s129 = sphi 0, %s127
      %s130 = sphi 0, %s129
      %s144 = sphi 0, %s130
      %s148 = sphi 0, %s148
      %s150 = sphi 0, %s148
      %s151 = sphi 0, %s150
      %s165 = sphi 0, %s151
      %s169 = sphi 0, %s169
      %s171 = sphi 0, %s169
      %s172 = sphi 0, %s171
      %s186 = sphi 0, %s172
      %s190 = sphi 0, %s190
      %s192 = sphi 0, %s190
      %s193 = sphi 0, %s192
      %s207 = sphi 0, %s193
      %s211 = sphi 0, %s211
      %s213 = sphi 0, %s211
      %s214 = sphi 0, %s213
      %s228 = sphi 0, %s214
      %s232 = sphi 0, %s232
      %s234 = sphi 0, %s232
      %s235 = sphi 0, %s234
      %s249 = sphi 0, %s235
      %s253 = sphi 0, %s253
      %s255 = sphi 0, %s253
      %s256 = sphi 0, %s255
      %s270 = sphi 0, %s256
      %s274 = sphi 0, %s274
      %s276 = sphi 0, %s274
      %s277 = sphi 0, %s276
      %s291 = sphi 0, %s277
      %s295 = sphi 0, %s295
      %s297 = sphi 0, %s295
      %s298 = sphi 0, %s297
      %s312 = sphi 0, %s298
      %s316 = sphi 0, %s316
      %s318 = sphi 0, %s316
      %s319 = sphi 0, %s318
      %s333 = sphi 0, %s319
      %s337 = sphi 0, %s337
      %s339 = sphi 0, %s337
      %s340 = sphi 0, %s339
      %s354 = sphi 0, %s340
      %s358 = sphi 0, %s358
      %s360 = sphi 0, %s358
      %s361 = sphi 0, %s360
      %s375 = sphi 0, %s361
      %s379 = sphi 0, %s379
      %s381 = sphi 0, %s379
      %s382 = sphi 0, %s381
      %s396 = sphi 0, %s382
      %s400 = sphi 0, %s400
      %s402 = sphi 0, %s400
      %s403 = sphi 0, %s402
      %s417 = sphi 0, %s403
      %s421 = sphi 0, %s421
      %s423 = sphi 0, %s421
      %s424 = sphi 0, %s423
      %s438 = sphi 0, %s424
      %s444 = sphi 0, %s446
      %s447 = sphi 0, %s444
      %s448 = sphi 0, %s447
      %s464 = sphi 0, %s448
      %s470 = sphi 0, %s472
      %s473 = sphi 0, %s470
      %s474 = sphi 0, %s473
      %s490 = sphi 0, %s474
    $region4: #{action_slot_forward.1} parent=1 // loop_header_branch
      %33 = sbr.rel (%p31) target = $region8
    $region5: #{action_slot_forward.1} parent=1 // loop_body
      %s35 = ssub.s32 %s30, 1
      %s36 = ssub.s32 %s30, 2
      %s37 = sadd.s32 %s30, 1
      %s38 = ssub.s32 %s30, %s37
      %p39 = scmp.eq.s32.totalorder %s38, 0
      %s41 = sadd.s32 %s40, 1
      %s42 = scalar_select %p39, %s40, %s41
      %p45 = pneg %p39
      %p46 = scmp.eq.s32.totalorder %s30, 1
      %p47 = por %p45, %p46
      %p48 = scmp.ne.s32.totalorder %s40, %s43
      %p49 = scmp.eq.s32.totalorder %s30, 0
      %p50 = por %p48, %p49
      %p51 = scmp.ne.s32.totalorder %s40, %s43
      %p52 = scmp.eq.s32.totalorder %s35, 1
      %p53 = por %p51, %p52
      %p54 = scmp.ne.s32.totalorder %s43, %s44
      %p55 = scmp.eq.s32.totalorder %s35, 0
      %p56 = por %p54, %p55
      %p57 = scmp.ne.s32.totalorder %s43, %s44
      %p58 = scmp.eq.s32.totalorder %s36, 1
      %p59 = por %p57, %p58
      %p61 = scmp.ne.s32.totalorder %s44, %s60
      %p62 = scmp.eq.s32.totalorder %s36, 0
      %p63 = por %p61, %p62
      %s65 = sadd.s32 %s64, 1
      %p68 = scmp.eq.s32.totalorder %s30, 1
      %p69 = scmp.ne.s32.totalorder %s64, %s66
      %p70 = scmp.eq.s32.totalorder %s30, 0
      %p71 = por %p69, %p70
      %p72 = scmp.ne.s32.totalorder %s64, %s66
      %p73 = scmp.eq.s32.totalorder %s35, 1
      %p74 = por %p72, %p73
      %p75 = scmp.ne.s32.totalorder %s66, %s67
      %p76 = scmp.eq.s32.totalorder %s35, 0
      %p77 = por %p75, %p76
      %p78 = scmp.ne.s32.totalorder %s66, %s67
      %p79 = scmp.eq.s32.totalorder %s36, 1
      %p80 = por %p78, %p79
      %p82 = scmp.ne.s32.totalorder %s67, %s81
      %p83 = scmp.eq.s32.totalorder %s36, 0
      %p84 = por %p82, %p83
      %s86 = sadd.s32 %s85, 1
      %p89 = scmp.eq.s32.totalorder %s30, 1
      %p90 = scmp.ne.s32.totalorder %s85, %s87
      %p91 = scmp.eq.s32.totalorder %s30, 0
      %p92 = por %p90, %p91
      %p93 = scmp.ne.s32.totalorder %s85, %s87
      %p94 = scmp.eq.s32.totalorder %s35, 1
      %p95 = por %p93, %p94
      %p96 = scmp.ne.s32.totalorder %s87, %s88
      %p97 = scmp.eq.s32.totalorder %s35, 0
      %p98 = por %p96, %p97
      %p99 = scmp.ne.s32.totalorder %s87, %s88
      %p100 = scmp.eq.s32.totalorder %s36, 1
      %p101 = por %p99, %p100
      %p103 = scmp.ne.s32.totalorder %s88, %s102
      %p104 = scmp.eq.s32.totalorder %s36, 0
      %p105 = por %p103, %p104
      %s107 = sadd.s32 %s106, 1
      %p110 = scmp.eq.s32.totalorder %s30, 1
      %p111 = scmp.ne.s32.totalorder %s106, %s108
      %p112 = scmp.eq.s32.totalorder %s30, 0
      %p113 = por %p111, %p112
      %p114 = scmp.ne.s32.totalorder %s106, %s108
      %p115 = scmp.eq.s32.totalorder %s35, 1
      %p116 = por %p114, %p115
      %p117 = scmp.ne.s32.totalorder %s108, %s109
      %p118 = scmp.eq.s32.totalorder %s35, 0
      %p119 = por %p117, %p118
      %p120 = scmp.ne.s32.totalorder %s108, %s109
      %p121 = scmp.eq.s32.totalorder %s36, 1
      %p122 = por %p120, %p121
      %p124 = scmp.ne.s32.totalorder %s109, %s123
      %p125 = scmp.eq.s32.totalorder %s36, 0
      %p126 = por %p124, %p125
      %s128 = sadd.s32 %s127, 1
      %p131 = scmp.eq.s32.totalorder %s30, 1
      %p132 = scmp.ne.s32.totalorder %s127, %s129
      %p133 = scmp.eq.s32.totalorder %s30, 0
      %p134 = por %p132, %p133
      %p135 = scmp.ne.s32.totalorder %s127, %s129
      %p136 = scmp.eq.s32.totalorder %s35, 1
      %p137 = por %p135, %p136
      %p138 = scmp.ne.s32.totalorder %s129, %s130
      %p139 = scmp.eq.s32.totalorder %s35, 0
      %p140 = por %p138, %p139
      %p141 = scmp.ne.s32.totalorder %s129, %s130
      %p142 = scmp.eq.s32.totalorder %s36, 1
      %p143 = por %p141, %p142
      %p145 = scmp.ne.s32.totalorder %s130, %s144
      %p146 = scmp.eq.s32.totalorder %s36, 0
      %p147 = por %p145, %p146
      %s149 = sadd.s32 %s148, 1
      %p152 = scmp.eq.s32.totalorder %s30, 1
      %p153 = scmp.ne.s32.totalorder %s148, %s150
      %p154 = scmp.eq.s32.totalorder %s30, 0
      %p155 = por %p153, %p154
      %p156 = scmp.ne.s32.totalorder %s148, %s150
      %p157 = scmp.eq.s32.totalorder %s35, 1
      %p158 = por %p156, %p157
      %p159 = scmp.ne.s32.totalorder %s150, %s151
      %p160 = scmp.eq.s32.totalorder %s35, 0
      %p161 = por %p159, %p160
      %p162 = scmp.ne.s32.totalorder %s150, %s151
      %p163 = scmp.eq.s32.totalorder %s36, 1
      %p164 = por %p162, %p163
      %p166 = scmp.ne.s32.totalorder %s151, %s165
      %p167 = scmp.eq.s32.totalorder %s36, 0
      %p168 = por %p166, %p167
      %s170 = sadd.s32 %s169, 1
      %p173 = scmp.eq.s32.totalorder %s30, 1
      %p174 = scmp.ne.s32.totalorder %s169, %s171
      %p175 = scmp.eq.s32.totalorder %s30, 0
      %p176 = por %p174, %p175
      %p177 = scmp.ne.s32.totalorder %s169, %s171
      %p178 = scmp.eq.s32.totalorder %s35, 1
      %p179 = por %p177, %p178
      %p180 = scmp.ne.s32.totalorder %s171, %s172
      %p181 = scmp.eq.s32.totalorder %s35, 0
      %p182 = por %p180, %p181
      %p183 = scmp.ne.s32.totalorder %s171, %s172
      %p184 = scmp.eq.s32.totalorder %s36, 1
      %p185 = por %p183, %p184
      %p187 = scmp.ne.s32.totalorder %s172, %s186
      %p188 = scmp.eq.s32.totalorder %s36, 0
      %p189 = por %p187, %p188
      %s191 = sadd.s32 %s190, 1
      %p194 = scmp.eq.s32.totalorder %s30, 1
      %p195 = scmp.ne.s32.totalorder %s190, %s192
      %p196 = scmp.eq.s32.totalorder %s30, 0
      %p197 = por %p195, %p196
      %p198 = scmp.ne.s32.totalorder %s190, %s192
      %p199 = scmp.eq.s32.totalorder %s35, 1
      %p200 = por %p198, %p199
      %p201 = scmp.ne.s32.totalorder %s192, %s193
      %p202 = scmp.eq.s32.totalorder %s35, 0
      %p203 = por %p201, %p202
      %p204 = scmp.ne.s32.totalorder %s192, %s193
      %p205 = scmp.eq.s32.totalorder %s36, 1
      %p206 = por %p204, %p205
      %p208 = scmp.ne.s32.totalorder %s193, %s207
      %p209 = scmp.eq.s32.totalorder %s36, 0
      %p210 = por %p208, %p209
      %s212 = sadd.s32 %s211, 1
      %p215 = scmp.eq.s32.totalorder %s30, 1
      %p216 = scmp.ne.s32.totalorder %s211, %s213
      %p217 = scmp.eq.s32.totalorder %s30, 0
      %p218 = por %p216, %p217
      %p219 = scmp.ne.s32.totalorder %s211, %s213
      %p220 = scmp.eq.s32.totalorder %s35, 1
      %p221 = por %p219, %p220
      %p222 = scmp.ne.s32.totalorder %s213, %s214
      %p223 = scmp.eq.s32.totalorder %s35, 0
      %p224 = por %p222, %p223
      %p225 = scmp.ne.s32.totalorder %s213, %s214
      %p226 = scmp.eq.s32.totalorder %s36, 1
      %p227 = por %p225, %p226
      %p229 = scmp.ne.s32.totalorder %s214, %s228
      %p230 = scmp.eq.s32.totalorder %s36, 0
      %p231 = por %p229, %p230
      %s233 = sadd.s32 %s232, 1
      %p236 = scmp.eq.s32.totalorder %s30, 1
      %p237 = scmp.ne.s32.totalorder %s232, %s234
      %p238 = scmp.eq.s32.totalorder %s30, 0
      %p239 = por %p237, %p238
      %p240 = scmp.ne.s32.totalorder %s232, %s234
      %p241 = scmp.eq.s32.totalorder %s35, 1
      %p242 = por %p240, %p241
      %p243 = scmp.ne.s32.totalorder %s234, %s235
      %p244 = scmp.eq.s32.totalorder %s35, 0
      %p245 = por %p243, %p244
      %p246 = scmp.ne.s32.totalorder %s234, %s235
      %p247 = scmp.eq.s32.totalorder %s36, 1
      %p248 = por %p246, %p247
      %p250 = scmp.ne.s32.totalorder %s235, %s249
      %p251 = scmp.eq.s32.totalorder %s36, 0
      %p252 = por %p250, %p251
      %s254 = sadd.s32 %s253, 1
      %p257 = scmp.eq.s32.totalorder %s30, 1
      %p258 = scmp.ne.s32.totalorder %s253, %s255
      %p259 = scmp.eq.s32.totalorder %s30, 0
      %p260 = por %p258, %p259
      %p261 = scmp.ne.s32.totalorder %s253, %s255
      %p262 = scmp.eq.s32.totalorder %s35, 1
      %p263 = por %p261, %p262
      %p264 = scmp.ne.s32.totalorder %s255, %s256
      %p265 = scmp.eq.s32.totalorder %s35, 0
      %p266 = por %p264, %p265
      %p267 = scmp.ne.s32.totalorder %s255, %s256
      %p268 = scmp.eq.s32.totalorder %s36, 1
      %p269 = por %p267, %p268
      %p271 = scmp.ne.s32.totalorder %s256, %s270
      %p272 = scmp.eq.s32.totalorder %s36, 0
      %p273 = por %p271, %p272
      %s275 = sadd.s32 %s274, 1
      %p278 = scmp.eq.s32.totalorder %s30, 1
      %p279 = scmp.ne.s32.totalorder %s274, %s276
      %p280 = scmp.eq.s32.totalorder %s30, 0
      %p281 = por %p279, %p280
      %p282 = scmp.ne.s32.totalorder %s274, %s276
      %p283 = scmp.eq.s32.totalorder %s35, 1
      %p284 = por %p282, %p283
      %p285 = scmp.ne.s32.totalorder %s276, %s277
      %p286 = scmp.eq.s32.totalorder %s35, 0
      %p287 = por %p285, %p286
      %p288 = scmp.ne.s32.totalorder %s276, %s277
      %p289 = scmp.eq.s32.totalorder %s36, 1
      %p290 = por %p288, %p289
      %p292 = scmp.ne.s32.totalorder %s277, %s291
      %p293 = scmp.eq.s32.totalorder %s36, 0
      %p294 = por %p292, %p293
      %s296 = sadd.s32 %s295, 1
      %p299 = scmp.eq.s32.totalorder %s30, 1
      %p300 = scmp.ne.s32.totalorder %s295, %s297
      %p301 = scmp.eq.s32.totalorder %s30, 0
      %p302 = por %p300, %p301
      %p303 = scmp.ne.s32.totalorder %s295, %s297
      %p304 = scmp.eq.s32.totalorder %s35, 1
      %p305 = por %p303, %p304
      %p306 = scmp.ne.s32.totalorder %s297, %s298
      %p307 = scmp.eq.s32.totalorder %s35, 0
      %p308 = por %p306, %p307
      %p309 = scmp.ne.s32.totalorder %s297, %s298
      %p310 = scmp.eq.s32.totalorder %s36, 1
      %p311 = por %p309, %p310
      %p313 = scmp.ne.s32.totalorder %s298, %s312
      %p314 = scmp.eq.s32.totalorder %s36, 0
      %p315 = por %p313, %p314
      %s317 = sadd.s32 %s316, 1
      %p320 = scmp.eq.s32.totalorder %s30, 1
      %p321 = scmp.ne.s32.totalorder %s316, %s318
      %p322 = scmp.eq.s32.totalorder %s30, 0
      %p323 = por %p321, %p322
      %p324 = scmp.ne.s32.totalorder %s316, %s318
      %p325 = scmp.eq.s32.totalorder %s35, 1
      %p326 = por %p324, %p325
      %p327 = scmp.ne.s32.totalorder %s318, %s319
      %p328 = scmp.eq.s32.totalorder %s35, 0
      %p329 = por %p327, %p328
      %p330 = scmp.ne.s32.totalorder %s318, %s319
      %p331 = scmp.eq.s32.totalorder %s36, 1
      %p332 = por %p330, %p331
      %p334 = scmp.ne.s32.totalorder %s319, %s333
      %p335 = scmp.eq.s32.totalorder %s36, 0
      %p336 = por %p334, %p335
      %s338 = sadd.s32 %s337, 1
      %p341 = scmp.eq.s32.totalorder %s30, 1
      %p342 = scmp.ne.s32.totalorder %s337, %s339
      %p343 = scmp.eq.s32.totalorder %s30, 0
      %p344 = por %p342, %p343
      %p345 = scmp.ne.s32.totalorder %s337, %s339
      %p346 = scmp.eq.s32.totalorder %s35, 1
      %p347 = por %p345, %p346
      %p348 = scmp.ne.s32.totalorder %s339, %s340
      %p349 = scmp.eq.s32.totalorder %s35, 0
      %p350 = por %p348, %p349
      %p351 = scmp.ne.s32.totalorder %s339, %s340
      %p352 = scmp.eq.s32.totalorder %s36, 1
      %p353 = por %p351, %p352
      %p355 = scmp.ne.s32.totalorder %s340, %s354
      %p356 = scmp.eq.s32.totalorder %s36, 0
      %p357 = por %p355, %p356
      %s359 = sadd.s32 %s358, 1
      %p362 = scmp.eq.s32.totalorder %s30, 1
      %p363 = scmp.ne.s32.totalorder %s358, %s360
      %p364 = scmp.eq.s32.totalorder %s30, 0
      %p365 = por %p363, %p364
      %p366 = scmp.ne.s32.totalorder %s358, %s360
      %p367 = scmp.eq.s32.totalorder %s35, 1
      %p368 = por %p366, %p367
      %p369 = scmp.ne.s32.totalorder %s360, %s361
      %p370 = scmp.eq.s32.totalorder %s35, 0
      %p371 = por %p369, %p370
      %p372 = scmp.ne.s32.totalorder %s360, %s361
      %p373 = scmp.eq.s32.totalorder %s36, 1
      %p374 = por %p372, %p373
      %p376 = scmp.ne.s32.totalorder %s361, %s375
      %p377 = scmp.eq.s32.totalorder %s36, 0
      %p378 = por %p376, %p377
      %s380 = sadd.s32 %s379, 1
      %p383 = scmp.eq.s32.totalorder %s30, 1
      %p384 = scmp.ne.s32.totalorder %s379, %s381
      %p385 = scmp.eq.s32.totalorder %s30, 0
      %p386 = por %p384, %p385
      %p387 = scmp.ne.s32.totalorder %s379, %s381
      %p388 = scmp.eq.s32.totalorder %s35, 1
      %p389 = por %p387, %p388
      %p390 = scmp.ne.s32.totalorder %s381, %s382
      %p391 = scmp.eq.s32.totalorder %s35, 0
      %p392 = por %p390, %p391
      %p393 = scmp.ne.s32.totalorder %s381, %s382
      %p394 = scmp.eq.s32.totalorder %s36, 1
      %p395 = por %p393, %p394
      %p397 = scmp.ne.s32.totalorder %s382, %s396
      %p398 = scmp.eq.s32.totalorder %s36, 0
      %p399 = por %p397, %p398
      %s401 = sadd.s32 %s400, 1
      %p404 = scmp.eq.s32.totalorder %s30, 1
      %p405 = scmp.ne.s32.totalorder %s400, %s402
      %p406 = scmp.eq.s32.totalorder %s30, 0
      %p407 = por %p405, %p406
      %p408 = scmp.ne.s32.totalorder %s400, %s402
      %p409 = scmp.eq.s32.totalorder %s35, 1
      %p410 = por %p408, %p409
      %p411 = scmp.ne.s32.totalorder %s402, %s403
      %p412 = scmp.eq.s32.totalorder %s35, 0
      %p413 = por %p411, %p412
      %p414 = scmp.ne.s32.totalorder %s402, %s403
      %p415 = scmp.eq.s32.totalorder %s36, 1
      %p416 = por %p414, %p415
      %p418 = scmp.ne.s32.totalorder %s403, %s417
      %p419 = scmp.eq.s32.totalorder %s36, 0
      %p420 = por %p418, %p419
      %s422 = sadd.s32 %s421, 1
      %p425 = scmp.eq.s32.totalorder %s30, 1
      %p426 = scmp.ne.s32.totalorder %s421, %s423
      %p427 = scmp.eq.s32.totalorder %s30, 0
      %p428 = por %p426, %p427
      %p429 = scmp.ne.s32.totalorder %s421, %s423
      %p430 = scmp.eq.s32.totalorder %s35, 1
      %p431 = por %p429, %p430
      %p432 = scmp.ne.s32.totalorder %s423, %s424
      %p433 = scmp.eq.s32.totalorder %s35, 0
      %p434 = por %p432, %p433
      %p435 = scmp.ne.s32.totalorder %s423, %s424
      %p436 = scmp.eq.s32.totalorder %s36, 1
      %p437 = por %p435, %p436
      %p439 = scmp.ne.s32.totalorder %s424, %s438
      %p440 = scmp.eq.s32.totalorder %s36, 0
      %p441 = por %p439, %p440
      %s442 = ssub.s32 %s30, %s37
      %p443 = scmp.eq.s32.totalorder %s442, 0
      %s445 = sadd.s32 %s444, 1
      %s446 = scalar_select %p443, %s444, %s445
      %p449 = pneg %p443
      %p450 = scmp.eq.s32.totalorder %s30, 1
      %p451 = por %p449, %p450
      %p452 = scmp.ne.s32.totalorder %s444, %s447
      %p453 = scmp.eq.s32.totalorder %s30, 0
      %p454 = por %p452, %p453
      %p455 = scmp.ne.s32.totalorder %s444, %s447
      %p456 = scmp.eq.s32.totalorder %s35, 1
      %p457 = por %p455, %p456
      %p458 = scmp.ne.s32.totalorder %s447, %s448
      %p459 = scmp.eq.s32.totalorder %s35, 0
      %p460 = por %p458, %p459
      %p461 = scmp.ne.s32.totalorder %s447, %s448
      %p462 = scmp.eq.s32.totalorder %s36, 1
      %p463 = por %p461, %p462
      %p465 = scmp.ne.s32.totalorder %s448, %s464
      %p466 = scmp.eq.s32.totalorder %s36, 0
      %p467 = por %p465, %p466
      %s468 = ssub.s32 %s30, %s37
      %p469 = scmp.eq.s32.totalorder %s468, 0
      %s471 = sadd.s32 %s470, 1
      %s472 = scalar_select %p469, %s470, %s471
      %p475 = pneg %p469
      %p476 = scmp.eq.s32.totalorder %s30, 1
      %p477 = por %p475, %p476
      %p478 = scmp.ne.s32.totalorder %s470, %s473
      %p479 = scmp.eq.s32.totalorder %s30, 0
      %p480 = por %p478, %p479
      %p481 = scmp.ne.s32.totalorder %s470, %s473
      %p482 = scmp.eq.s32.totalorder %s35, 1
      %p483 = por %p481, %p482
      %p484 = scmp.ne.s32.totalorder %s473, %s474
      %p485 = scmp.eq.s32.totalorder %s35, 0
      %p486 = por %p484, %p485
      %p487 = scmp.ne.s32.totalorder %s473, %s474
      %p488 = scmp.eq.s32.totalorder %s36, 1
      %p489 = por %p487, %p488
      %p491 = scmp.ne.s32.totalorder %s474, %s490
      %p492 = scmp.eq.s32.totalorder %s36, 0
      %p493 = por %p491, %p492
      %p494 = scmp.le.s32.totalorder 1, %s30
      %p495 = scmp.lt.s32.totalorder %s30, 3
      %p496 = pnand %p494, %p495
      %p497 = pneg %p496
      // Predicated region
      $region9: #{action_slot_forward.1} parent=5 // pred_check
        _
      $region10: #{action_slot_forward.1} parent=5 // pred_check_branch
        %499 = sbr.rel (%p496) target = $region12
      $region11: #{action_slot_forward.1} parent=5 // pred_region
        %s500 = ssub.s32 %s30, 1
        // Predicated region
        $region13: #{action_slot_forward.1} parent=11 // pred_check
          %p501 = pneg %p77
        $region14: #{action_slot_forward.1} parent=11 // pred_check_branch
          %503 = sbr.rel (%p501) target = $region16
        $region15: #{action_slot_forward.1} parent=11 // pred_region
          _
        $region16: #{action_slot_forward.1} parent=11 // pred_fallthru
          _
        // Predicated region
        $region17: #{action_slot_forward.1} parent=11 // pred_check
          %p504 = pneg %p98
        $region18: #{action_slot_forward.1} parent=11 // pred_check_branch
          %506 = sbr.rel (%p504) target = $region20
        $region19: #{action_slot_forward.1} parent=11 // pred_region
          _
        $region20: #{action_slot_forward.1} parent=11 // pred_fallthru
          _
        // Predicated region
        $region21: #{action_slot_forward.1} parent=11 // pred_check
          %p507 = pneg %p119
        $region22: #{action_slot_forward.1} parent=11 // pred_check_branch
          %509 = sbr.rel (%p507) target = $region24
        $region23: #{action_slot_forward.1} parent=11 // pred_region
          _
        $region24: #{action_slot_forward.1} parent=11 // pred_fallthru
          _
        // Predicated region
        $region25: #{action_slot_forward.1} parent=11 // pred_check
          %p510 = pneg %p140
        $region26: #{action_slot_forward.1} parent=11 // pred_check_branch
          %512 = sbr.rel (%p510) target = $region28
        $region27: #{action_slot_forward.1} parent=11 // pred_region
          _
        $region28: #{action_slot_forward.1} parent=11 // pred_fallthru
          _
        // Predicated region
        $region29: #{action_slot_forward.1} parent=11 // pred_check
          %p513 = pneg %p161
        $region30: #{action_slot_forward.1} parent=11 // pred_check_branch
          %515 = sbr.rel (%p513) target = $region32
        $region31: #{action_slot_forward.1} parent=11 // pred_region
          _
        $region32: #{action_slot_forward.1} parent=11 // pred_fallthru
          _
        // Predicated region
        $region33: #{action_slot_forward.1} parent=11 // pred_check
          %p516 = pneg %p182
        $region34: #{action_slot_forward.1} parent=11 // pred_check_branch
          %518 = sbr.rel (%p516) target = $region36
        $region35: #{action_slot_forward.1} parent=11 // pred_region
          _
        $region36: #{action_slot_forward.1} parent=11 // pred_fallthru
          _
        // Predicated region
        $region37: #{action_slot_forward.1} parent=11 // pred_check
          %p519 = pneg %p203
        $region38: #{action_slot_forward.1} parent=11 // pred_check_branch
          %521 = sbr.rel (%p519) target = $region40
        $region39: #{action_slot_forward.1} parent=11 // pred_region
          _
        $region40: #{action_slot_forward.1} parent=11 // pred_fallthru
          _
        // Predicated region
        $region41: #{action_slot_forward.1} parent=11 // pred_check
          %p522 = pneg %p224
        $region42: #{action_slot_forward.1} parent=11 // pred_check_branch
          %524 = sbr.rel (%p522) target = $region44
        $region43: #{action_slot_forward.1} parent=11 // pred_region
          _
        $region44: #{action_slot_forward.1} parent=11 // pred_fallthru
          _
        // Predicated region
        $region45: #{action_slot_forward.1} parent=11 // pred_check
          %p525 = pneg %p245
        $region46: #{action_slot_forward.1} parent=11 // pred_check_branch
          %527 = sbr.rel (%p525) target = $region48
        $region47: #{action_slot_forward.1} parent=11 // pred_region
          _
        $region48: #{action_slot_forward.1} parent=11 // pred_fallthru
          _
        // Predicated region
        $region49: #{action_slot_forward.1} parent=11 // pred_check
          %p528 = pneg %p266
        $region50: #{action_slot_forward.1} parent=11 // pred_check_branch
          %530 = sbr.rel (%p528) target = $region52
        $region51: #{action_slot_forward.1} parent=11 // pred_region
          _
        $region52: #{action_slot_forward.1} parent=11 // pred_fallthru
          _
        // Predicated region
        $region53: #{action_slot_forward.1} parent=11 // pred_check
          %p531 = pneg %p287
        $region54: #{action_slot_forward.1} parent=11 // pred_check_branch
          %533 = sbr.rel (%p531) target = $region56
        $region55: #{action_slot_forward.1} parent=11 // pred_region
          _
        $region56: #{action_slot_forward.1} parent=11 // pred_fallthru
          _
        // Predicated region
        $region57: #{action_slot_forward.1} parent=11 // pred_check
          %p534 = pneg %p308
        $region58: #{action_slot_forward.1} parent=11 // pred_check_branch
          %536 = sbr.rel (%p534) target = $region60
        $region59: #{action_slot_forward.1} parent=11 // pred_region
          _
        $region60: #{action_slot_forward.1} parent=11 // pred_fallthru
          _
        // Predicated region
        $region61: #{action_slot_forward.1} parent=11 // pred_check
          %p537 = pneg %p329
        $region62: #{action_slot_forward.1} parent=11 // pred_check_branch
          %539 = sbr.rel (%p537) target = $region64
        $region63: #{action_slot_forward.1} parent=11 // pred_region
          _
        $region64: #{action_slot_forward.1} parent=11 // pred_fallthru
          _
        // Predicated region
        $region65: #{action_slot_forward.1} parent=11 // pred_check
          %p540 = pneg %p350
        $region66: #{action_slot_forward.1} parent=11 // pred_check_branch
          %542 = sbr.rel (%p540) target = $region68
        $region67: #{action_slot_forward.1} parent=11 // pred_region
          _
        $region68: #{action_slot_forward.1} parent=11 // pred_fallthru
          _
        // Predicated region
        $region69: #{action_slot_forward.1} parent=11 // pred_check
          %p543 = pneg %p371
        $region70: #{action_slot_forward.1} parent=11 // pred_check_branch
          %545 = sbr.rel (%p543) target = $region72
        $region71: #{action_slot_forward.1} parent=11 // pred_region
          _
        $region72: #{action_slot_forward.1} parent=11 // pred_fallthru
          _
        // Predicated region
        $region73: #{action_slot_forward.1} parent=11 // pred_check
          %p546 = pneg %p392
        $region74: #{action_slot_forward.1} parent=11 // pred_check_branch
          %548 = sbr.rel (%p546) target = $region76
        $region75: #{action_slot_forward.1} parent=11 // pred_region
          _
        $region76: #{action_slot_forward.1} parent=11 // pred_fallthru
          _
        // Predicated region
        $region77: #{action_slot_forward.1} parent=11 // pred_check
          %p549 = pneg %p413
        $region78: #{action_slot_forward.1} parent=11 // pred_check_branch
          %551 = sbr.rel (%p549) target = $region80
        $region79: #{action_slot_forward.1} parent=11 // pred_region
          _
        $region80: #{action_slot_forward.1} parent=11 // pred_fallthru
          _
        // Predicated region
        $region81: #{action_slot_forward.1} parent=11 // pred_check
          %p552 = pneg %p434
        $region82: #{action_slot_forward.1} parent=11 // pred_check_branch
          %554 = sbr.rel (%p552) target = $region84
        $region83: #{action_slot_forward.1} parent=11 // pred_region
          _
        $region84: #{action_slot_forward.1} parent=11 // pred_fallthru
          _
      $region12: #{action_slot_forward.1} parent=5 // pred_fallthru
        _
      %p555 = scmp.lt.s32.totalorder %s30, 2
      // Predicated region
      $region85: #{action_slot_forward.1} parent=5 // pred_check
        %p556 = pneg %p555
      $region86: #{action_slot_forward.1} parent=5 // pred_check_branch
        %558 = sbr.rel (%p556) target = $region88
      $region87: #{action_slot_forward.1} parent=5 // pred_region
        // Predicated region
        $region89: #{action_slot_forward.1} parent=87 // pred_check
          %p559 = pneg %p50
        $region90: #{action_slot_forward.1} parent=87 // pred_check_branch
          %561 = sbr.rel (%p559) target = $region92
        $region91: #{action_slot_forward.1} parent=87 // pred_region
          %p562 = scmp.lt.s32.totalorder %s30, 1
          %s563 = scalar_select %p562, %s30, 1
          %s564 = smul.addr %s563, 2
          %s565 = smul.addr %s564, 8
          %s566 = scalar_lea.vmem %s0, %s565
        $region92: #{action_slot_forward.1} parent=87 // pred_fallthru
          _
      $region88: #{action_slot_forward.1} parent=5 // pred_fallthru
        _
      %p567 = scmp.le.s32.totalorder 1, %s30
      %p568 = scmp.lt.s32.totalorder %s30, 3
      %p569 = pnand %p567, %p568
      %p570 = pneg %p569
      // Predicated region
      $region93: #{action_slot_forward.1} parent=5 // pred_check
        _
      $region94: #{action_slot_forward.1} parent=5 // pred_check_branch
        %572 = sbr.rel (%p569) target = $region96
      $region95: #{action_slot_forward.1} parent=5 // pred_region
        %s573 = ssub.s32 %s30, 1
        %p574 = scmp.lt.s32.totalorder %s35, 1
        %s575 = scalar_select %p574, %s35, 1
        %s576 = smul.addr %s575, 2
        %s577 = smul.addr %s576, 8
        %s578 = scalar_lea.vmem %s0, %s577
        %p579 = pneg %p56
        %p580 = pneg %p53
        %p581 = pneg %p77
        %p582 = pneg %p74
        %p583 = pneg %p98
        %p584 = pneg %p95
        %p585 = pneg %p119
        %p586 = pneg %p116
        %p587 = pneg %p140
        %p588 = pneg %p137
        %p589 = pneg %p161
        %p590 = pneg %p158
        %p591 = pneg %p182
        %p592 = pneg %p179
        %p593 = pneg %p203
        %p594 = pneg %p200
        %p595 = pneg %p224
        %p596 = pneg %p221
        %p597 = pneg %p245
        %p598 = pneg %p242
        %p599 = pneg %p266
        %p600 = pneg %p263
        %p601 = pneg %p287
        %p602 = pneg %p284
        %p603 = pneg %p308
        %p604 = pneg %p305
        %p605 = pneg %p329
        %p606 = pneg %p326
        %p607 = pneg %p350
        %p608 = pneg %p347
        %p609 = pneg %p371
        %p610 = pneg %p368
        %p611 = pneg %p392
        %p612 = pneg %p389
        %p613 = pneg %p413
        %p614 = pneg %p410
        %p615 = pneg %p434
        %p616 = pneg %p431
        %p617 = pneg %p460
        %p618 = pneg %p457
        %s619 = sand.u32 %s447, 1
        %s620 = scalar_lea.sflag [#allocation3], %s619
        %s621 = sand.u32 %s447, 1
        %s622 = scalar_lea.vmem [#allocation2], %s621
        %p623 = pneg %p486
        %p624 = pneg %p483
        %p625 = scmp.lt.s32.totalorder %s35, 1
        %s626 = scalar_select %p625, %s35, 1
        %s627 = smul.addr %s626, 2
        %s628 = smul.addr %s627, 8
        %s629 = scalar_lea.vmem %s20, %s628
        %p630 = scmp.lt.s32.totalorder %s35, 1
        %s631 = scalar_select %p630, %s35, 1
        %s632 = smul.addr %s631, 2
        %s633 = smul.addr %s632, 8
        %s634 = scalar_lea.vmem %s0, %s633
        %p635 = scmp.lt.s32.totalorder %s35, 1
        %s636 = scalar_select %p635, %s35, 1
        %s637 = smul.addr %s636, 2
        %s638 = smul.addr %s637, 8
        %s639 = scalar_lea.vmem %s20, %s638
        %v640 = vld [vmem:[%s634] sm:$0xff]
        %v641 = vld [vmem:[%s634 + $0x8] sm:$0xff]
        %v642 = vmax.f32 %v640, 0.0
        %v643 = vmax.f32 %v641, 0.0
        %v644 = vld [vmem:[%s1] sm:$0xff]
        %v645 = vld [vmem:[%s1 + $0x8] sm:$0xff]
        %647 = vset.pattern.permute.xlu0 0
        %648 = vperm.xlu0 %647, %v644
        %v649 = vpop.permute.xlu0 %648
        %652 = vset.pattern.permute.xlu0 0
        %653 = vperm.xlu0 %652, %v645
        %v654 = vpop.permute.xlu0 %653
        %v656 = vmul.f32 %v642, %v649
        %v657 = vmul.f32 %v643, %v654
        %s658 = scalar_lea.vmem %s1, 16
        %v659 = vld [vmem:[%s658] sm:$0xff]
        %v660 = vld [vmem:[%s658 + $0x8] sm:$0xff]
        %662 = vset.pattern.permute.xlu0 0
        %663 = vperm.xlu0 %662, %v659
        %v664 = vpop.permute.xlu0 %663
        %667 = vset.pattern.permute.xlu0 0
        %668 = vperm.xlu0 %667, %v660
        %v669 = vpop.permute.xlu0 %668
        %v671 = vadd.f32 %v656, %v664
        %v672 = vadd.f32 %v657, %v669
        %v673 = vld [vmem:[%s2] sm:$0xff]
        %v674 = vld [vmem:[%s2 + $0x8] sm:$0xff]
        %v675 = vld [vmem:[%s2 + $0x10] sm:$0xff]
        %v676 = vld [vmem:[%s2 + $0x18] sm:$0xff]
        %v677 = vld [vmem:[%s3] sm:$0xff]
        %v678 = vld [vmem:[%s3 + $0x8] sm:$0xff]
        %v679 = vld [vmem:[%s3 + $0x10] sm:$0xff]
        %v680 = vld [vmem:[%s3 + $0x18] sm:$0xff]
        %682 = vset.pattern.permute.xlu0 0
        %683 = vperm.xlu0 %682, %v677
        %v684 = vpop.permute.xlu0 %683
        %687 = vset.pattern.permute.xlu0 0
        %688 = vperm.xlu0 %687, %v678
        %v689 = vpop.permute.xlu0 %688
        %692 = vset.pattern.permute.xlu0 0
        %693 = vperm.xlu0 %692, %v679
        %v694 = vpop.permute.xlu0 %693
        %697 = vset.pattern.permute.xlu0 0
        %698 = vperm.xlu0 %697, %v680
        %v699 = vpop.permute.xlu0 %698
        %vm701 = vcmask 130048
        %v703 = vsel %vm701, %v673, 0
        %v706 = vsel %vm701, %v674, 0
        %v709 = vsel %vm701, %v675, 0
        %v712 = vsel %vm701, %v676, 0
        %714 = vmatprep.subr.mxu0 0.0
        %715 = vmatpush1.msra.mxu0 %v671
        %716 = vmatprep.subr.mxu0 0.0
        %717 = vmatpush1.msra.mxu0 %v672
        %718 = vmatprep.subr.mxu0 0.0
        %719 = vmatpush1.msra.mxu0 0.0
        %720 = vmatprep.subr.mxu0 0.0
        %721 = vmatpush1.msra.mxu0 0.0
        %722 = vmatprep.subr.mxu0 0.0
        %723 = vmatpush1.msra.mxu0 0.0
        %724 = vmatprep.subr.mxu0 0.0
        %725 = vmatpush1.msra.mxu0 0.0
        %726 = vmatprep.subr.mxu0 0.0
        %727 = vmatpush1.msra.mxu0 0.0
        %728 = vmatprep.subr.mxu0 0.0
        %729 = vmatpush1.msra.mxu0 0.0
        %730 = vmatprep.subr.mxu0 0.0
        %731 = vmatpush1.msra.mxu0 0.0
        %732 = vmatprep.subr.mxu0 0.0
        %733 = vmatpush1.msra.mxu0 0.0
        %734 = vmatprep.subr.mxu0 0.0
        %735 = vmatpush1.msra.mxu0 0.0
        %736 = vmatprep.subr.mxu0 0.0
        %737 = vmatpush1.msra.mxu0 0.0
        %738 = vmatprep.subr.mxu0 0.0
        %739 = vmatpush1.msra.mxu0 0.0
        %740 = vmatprep.subr.mxu0 0.0
        %741 = vmatpush1.msra.mxu0 0.0
        %742 = vmatprep.subr.mxu0 0.0
        %743 = vmatpush1.msra.mxu0 0.0
        %744 = vmatprep.subr.mxu0 0.0
        %745 = vmatpush1.msra.mxu0 0.0
        %746 = vmatprep.subr.mxu0 0.0
        %747 = vmatpush1.msra.mxu0 0.0
        %748 = vmatprep.subr.mxu0 0.0
        %749 = vmatpush1.msra.mxu0 0.0
        %750 = vmatprep.subr.mxu0 0.0
        %751 = vmatpush1.msra.mxu0 0.0
        %752 = vmatprep.subr.mxu0 0.0
        %753 = vmatpush1.msra.mxu0 0.0
        %754 = vmatprep.subr.mxu0 0.0
        %755 = vmatpush1.msra.mxu0 0.0
        %756 = vmatprep.subr.mxu0 0.0
        %757 = vmatpush1.msra.mxu0 0.0
        %758 = vmatprep.subr.mxu0 0.0
        %759 = vmatpush1.msra.mxu0 0.0
        %760 = vmatprep.subr.mxu0 0.0
        %761 = vmatpush1.msra.mxu0 0.0
        %762 = vmatprep.subr.mxu0 0.0
        %763 = vmatpush1.msra.mxu0 0.0
        %764 = vmatprep.subr.mxu0 0.0
        %765 = vmatpush1.msra.mxu0 0.0
        %766 = vmatprep.subr.mxu0 0.0
        %767 = vmatpush1.msra.mxu0 0.0
        %768 = vmatprep.subr.mxu0 0.0
        %769 = vmatpush1.msra.mxu0 0.0
        %770 = vmatprep.subr.mxu0 0.0
        %771 = vmatpush1.msra.mxu0 0.0
        %772 = vmatprep.subr.mxu0 0.0
        %773 = vmatpush1.msra.mxu0 0.0
        %774 = vmatprep.subr.mxu0 0.0
        %775 = vmatpush1.msra.mxu0 0.0
        %776 = vmatprep.subr.mxu0 0.0
        %777 = vmatpush1.msra.mxu0 0.0
        %778 = vmatprep.mubr.f32.mxu0 0.0
        %779 = vmatmul.mubr.f32.gmra.mrb[0].mxu0 %v703
        %v780 = vpop.f32.mrb[0].mxu0
        %v781 = vadd.f32 %v684, %v780
        %v782 = vpop.f32.mrb[0].mxu0
        %783 = vmatprep.mubr.f32.mxu0 0.0
        %784 = vmatmul.mubr.f32.gmra.mrb[0].mxu0 %v706
        %v785 = vpop.f32.mrb[0].mxu0
        %v786 = vadd.f32 %v689, %v785
        %v787 = vpop.f32.mrb[0].mxu0
        %788 = vmatprep.mubr.f32.mxu0 0.0
        %789 = vmatmul.mubr.f32.gmra.mrb[0].mxu0 %v709
        %v790 = vpop.f32.mrb[0].mxu0
        %v791 = vadd.f32 %v694, %v790
        %v792 = vpop.f32.mrb[0].mxu0
        %793 = vmatprep.mubr.f32.mxu0 0.0
        %794 = vmatmul.mubr.f32.gmra.mrb[0].mxu0 %v712
        %v795 = vpop.f32.mrb[0].mxu0
        %v796 = vadd.f32 %v699, %v795
        %v797 = vpop.f32.mrb[0].mxu0
        %798 = vdwg.mxu0
        %v799 = vmax.f32 %v781, 0.0
        %v800 = vmax.f32 %v786, 0.0
        %v801 = vmax.f32 %v791, 0.0
        %v802 = vmax.f32 %v796, 0.0
        %v803 = vld [vmem:[%s4] sm:$0xff]
        %v804 = vld [vmem:[%s5] sm:$0xff]
        %v805 = vld [vmem:[%s5 + $0x8] sm:$0xff]
        %v806 = vld [vmem:[%s5 + $0x10] sm:$0xff]
        %v807 = vld [vmem:[%s5 + $0x18] sm:$0xff]
        %vm808 = vcmask 64512
        %v810 = vsel %vm808, %v799, 0
        %v813 = vsel %vm808, %v800, 0
        %v816 = vsel %vm808, %v801, 0
        %v819 = vsel %vm808, %v802, 0
        %821 = vmatprep.subr.mxu0 0.0
        %822 = vmatpush1.msra.mxu0 %v803
        %823 = vmatprep.subr.mxu0 0.0
        %824 = vmatpush1.msra.mxu0 0.0
        %825 = vmatprep.subr.mxu0 0.0
        %826 = vmatpush1.msra.mxu0 0.0
        %827 = vmatprep.subr.mxu0 0.0
        %828 = vmatpush1.msra.mxu0 0.0
        %829 = vmatprep.subr.mxu0 0.0
        %830 = vmatpush1.msra.mxu0 0.0
        %831 = vmatprep.subr.mxu0 0.0
        %832 = vmatpush1.msra.mxu0 0.0
        %833 = vmatprep.subr.mxu0 0.0
        %834 = vmatpush1.msra.mxu0 0.0
        %835 = vmatprep.subr.mxu0 0.0
        %836 = vmatpush1.msra.mxu0 0.0
        %837 = vmatprep.subr.mxu0 0.0
        %838 = vmatpush1.msra.mxu0 0.0
        %839 = vmatprep.subr.mxu0 0.0
        %840 = vmatpush1.msra.mxu0 0.0
        %841 = vmatprep.subr.mxu0 0.0
        %842 = vmatpush1.msra.mxu0 0.0
        %843 = vmatprep.subr.mxu0 0.0
        %844 = vmatpush1.msra.mxu0 0.0
        %845 = vmatprep.subr.mxu0 0.0
        %846 = vmatpush1.msra.mxu0 0.0
        %847 = vmatprep.subr.mxu0 0.0
        %848 = vmatpush1.msra.mxu0 0.0
        %849 = vmatprep.subr.mxu0 0.0
        %850 = vmatpush1.msra.mxu0 0.0
        %851 = vmatprep.subr.mxu0 0.0
        %852 = vmatpush1.msra.mxu0 0.0
        %853 = vmatprep.subr.mxu0 0.0
        %854 = vmatpush1.msra.mxu0 0.0
        %855 = vmatprep.subr.mxu0 0.0
        %856 = vmatpush1.msra.mxu0 0.0
        %857 = vmatprep.subr.mxu0 0.0
        %858 = vmatpush1.msra.mxu0 0.0
        %859 = vmatprep.subr.mxu0 0.0
        %860 = vmatpush1.msra.mxu0 0.0
        %861 = vmatprep.subr.mxu0 0.0
        %862 = vmatpush1.msra.mxu0 0.0
        %863 = vmatprep.subr.mxu0 0.0
        %864 = vmatpush1.msra.mxu0 0.0
        %865 = vmatprep.subr.mxu0 0.0
        %866 = vmatpush1.msra.mxu0 0.0
        %867 = vmatprep.subr.mxu0 0.0
        %868 = vmatpush1.msra.mxu0 0.0
        %869 = vmatprep.subr.mxu0 0.0
        %870 = vmatpush1.msra.mxu0 0.0
        %871 = vmatprep.subr.mxu0 0.0
        %872 = vmatpush1.msra.mxu0 0.0
        %873 = vmatprep.subr.mxu0 0.0
        %874 = vmatpush1.msra.mxu0 0.0
        %875 = vmatprep.subr.mxu0 0.0
        %876 = vmatpush1.msra.mxu0 0.0
        %877 = vmatprep.subr.mxu0 0.0
        %878 = vmatpush1.msra.mxu0 0.0
        %879 = vmatprep.subr.mxu0 0.0
        %880 = vmatpush1.msra.mxu0 0.0
        %881 = vmatprep.subr.mxu0 0.0
        %882 = vmatpush1.msra.mxu0 0.0
        %883 = vmatprep.subr.mxu0 0.0
        %884 = vmatpush1.msra.mxu0 0.0
        %885 = vmatprep.mubr.f32.mxu0 0.0
        %886 = vmatmul.mubr.f32.gmra.mrb[0].mxu0 %v810
        %v887 = vpop.f32.mrb[0].mxu0
        %v888 = vadd.f32 %v804, %v887
        %v889 = vpop.f32.mrb[0].mxu0
        %890 = vmatprep.mubr.f32.mxu0 0.0
        %891 = vmatmul.mubr.f32.gmra.mrb[0].mxu0 %v813
        %v892 = vpop.f32.mrb[0].mxu0
        %v893 = vadd.f32 %v805, %v892
        %v894 = vpop.f32.mrb[0].mxu0
        %895 = vmatprep.mubr.f32.mxu0 0.0
        %896 = vmatmul.mubr.f32.gmra.mrb[0].mxu0 %v816
        %v897 = vpop.f32.mrb[0].mxu0
        %v898 = vadd.f32 %v806, %v897
        %v899 = vpop.f32.mrb[0].mxu0
        %900 = vmatprep.mubr.f32.mxu0 0.0
        %901 = vmatmul.mubr.f32.gmra.mrb[0].mxu0 %v819
        %v902 = vpop.f32.mrb[0].mxu0
        %v903 = vadd.f32 %v807, %v902
        %v904 = vpop.f32.mrb[0].mxu0
        %905 = vdwg.mxu0
        %v906 = vadd.f32 %v888, %v893
        %v907 = vadd.f32 %v906, %v898
        %v908 = vadd.f32 %v907, %v903
        %v909 = vrot.slane %v908, 4
        %v910 = vadd.f32 %v908, %v909
        %v911 = vrot.slane %v910, 2
        %v912 = vadd.f32 %v910, %v911
        %v913 = vrot.slane %v912, 1
        %v914 = vadd.f32 %v912, %v913
        %v915 = vrcp.pop 32.0
        %v916 = vmul.f32 %v914, %v915
        %v917 = vsub.f32 %v888, %v916
        %v918 = vsub.f32 %v893, %v916
        %v919 = vsub.f32 %v898, %v916
        %v920 = vsub.f32 %v903, %v916
        %v921 = vmul.f32 %v917, %v917
        %v922 = vmul.f32 %v918, %v918
        %v923 = vmul.f32 %v919, %v919
        %v924 = vmul.f32 %v920, %v920
        %v925 = vadd.f32 %v921, %v922
        %v926 = vadd.f32 %v925, %v923
        %v927 = vadd.f32 %v926, %v924
        %v928 = vrot.slane %v927, 4
        %v929 = vadd.f32 %v927, %v928
        %v930 = vrot.slane %v929, 2
        %v931 = vadd.f32 %v929, %v930
        %v932 = vrot.slane %v931, 1
        %v933 = vadd.f32 %v931, %v932
        %v934 = vmul.f32 %v933, %v915
        %v935 = vadd.f32 %v934, 1e-05
        %v936 = vrsqrt.pop %v935
        %v937 = vmul.f32 %v917, %v936
        %v938 = vmul.f32 %v918, %v936
        %v939 = vmul.f32 %v919, %v936
        %v940 = vmul.f32 %v920, %v936
        %v941 = vld [vmem:[%s10] sm:$0xff]
        %v942 = vld [vmem:[%s10 + $0x8] sm:$0xff]
        %v943 = vld [vmem:[%s10 + $0x10] sm:$0xff]
        %v944 = vld [vmem:[%s10 + $0x18] sm:$0xff]
        %946 = vset.pattern.permute.xlu0 0
        %947 = vperm.xlu0 %946, %v941
        %v948 = vpop.permute.xlu0 %947
        %951 = vset.pattern.permute.xlu0 0
        %952 = vperm.xlu0 %951, %v942
        %v953 = vpop.permute.xlu0 %952
        %956 = vset.pattern.permute.xlu0 0
        %957 = vperm.xlu0 %956, %v943
        %v958 = vpop.permute.xlu0 %957
        %961 = vset.pattern.permute.xlu0 0
        %962 = vperm.xlu0 %961, %v944
        %v963 = vpop.permute.xlu0 %962
        %v965 = vmul.f32 %v937, %v948
        %v966 = vmul.f32 %v938, %v953
        %v967 = vmul.f32 %v939, %v958
        %v968 = vmul.f32 %v940, %v963
        %v969 = vld [vmem:[%s11] sm:$0xff]
        %v970 = vld [vmem:[%s11 + $0x8] sm:$0xff]
        %v971 = vld [vmem:[%s11 + $0x10] sm:$0xff]
        %v972 = vld [vmem:[%s11 + $0x18] sm:$0xff]
        %974 = vset.pattern.permute.xlu0 0
        %975 = vperm.xlu0 %974, %v969
        %v976 = vpop.permute.xlu0 %975
        %979 = vset.pattern.permute.xlu0 0
        %980 = vperm.xlu0 %979, %v970
        %v981 = vpop.permute.xlu0 %980
        %984 = vset.pattern.permute.xlu0 0
        %985 = vperm.xlu0 %984, %v971
        %v986 = vpop.permute.xlu0 %985
        %989 = vset.pattern.permute.xlu0 0
        %990 = vperm.xlu0 %989, %v972
        %v991 = vpop.permute.xlu0 %990
        %v993 = vadd.f32 %v965, %v976
        %v994 = vadd.f32 %v966, %v981
        %v995 = vadd.f32 %v967, %v986
        %v996 = vadd.f32 %v968, %v991
        %v997 = vld [vmem:[%s6] sm:$0xff]
        %v998 = vld [vmem:[%s6 + $0x8] sm:$0xff]
        %v999 = vld [vmem:[%s6 + $0x10] sm:$0xff]
        %v1000 = vld [vmem:[%s6 + $0x18] sm:$0xff]
        %v1001 = vld [vmem:[%s7] sm:$0xff]
        %v1002 = vld [vmem:[%s7 + $0x8] sm:$0xff]
        %v1003 = vld [vmem:[%s7 + $0x10] sm:$0xff]
        %v1004 = vld [vmem:[%s7 + $0x18] sm:$0xff]
        %1006 = vset.pattern.permute.xlu0 0
        %1007 = vperm.xlu0 %1006, %v1001
        %v1008 = vpop.permute.xlu0 %1007
        %1011 = vset.pattern.permute.xlu0 0
        %1012 = vperm.xlu0 %1011, %v1002
        %v1013 = vpop.permute.xlu0 %1012
        %1016 = vset.pattern.permute.xlu0 0
        %1017 = vperm.xlu0 %1016, %v1003
        %v1018 = vpop.permute.xlu0 %1017
        %1021 = vset.pattern.permute.xlu0 0
        %1022 = vperm.xlu0 %1021, %v1004
        %v1023 = vpop.permute.xlu0 %1022
        %vm1025 = vcmask 261120
        %v1027 = vsel %vm1025, %v997, 0
        %v1030 = vsel %vm1025, %v998, 0
        %v1033 = vsel %vm1025, %v999, 0
        %v1036 = vsel %vm1025, %v1000, 0
        %1038 = vmatprep.subr.mxu0 0.0
        %1039 = vmatpush1.msra.mxu0 %v993
        %1040 = vmatprep.subr.mxu0 0.0
        %1041 = vmatpush1.msra.mxu0 %v994
        %1042 = vmatprep.subr.mxu0 0.0
        %1043 = vmatpush1.msra.mxu0 %v995
        %1044 = vmatprep.subr.mxu0 0.0
        %1045 = vmatpush1.msra.mxu0 %v996
        %1046 = vmatprep.subr.mxu0 0.0
        %1047 = vmatpush1.msra.mxu0 0.0
        %1048 = vmatprep.subr.mxu0 0.0
        %1049 = vmatpush1.msra.mxu0 0.0
        %1050 = vmatprep.subr.mxu0 0.0
        %1051 = vmatpush1.msra.mxu0 0.0
        %1052 = vmatprep.subr.mxu0 0.0
        %1053 = vmatpush1.msra.mxu0 0.0
        %1054 = vmatprep.subr.mxu0 0.0
        %1055 = vmatpush1.msra.mxu0 0.0
        %1056 = vmatprep.subr.mxu0 0.0
        %1057 = vmatpush1.msra.mxu0 0.0
        %1058 = vmatprep.subr.mxu0 0.0
        %1059 = vmatpush1.msra.mxu0 0.0
        %1060 = vmatprep.subr.mxu0 0.0
        %1061 = vmatpush1.msra.mxu0 0.0
        %1062 = vmatprep.subr.mxu0 0.0
        %1063 = vmatpush1.msra.mxu0 0.0
        %1064 = vmatprep.subr.mxu0 0.0
        %1065 = vmatpush1.msra.mxu0 0.0
        %1066 = vmatprep.subr.mxu0 0.0
        %1067 = vmatpush1.msra.mxu0 0.0
        %1068 = vmatprep.subr.mxu0 0.0
        %1069 = vmatpush1.msra.mxu0 0.0
        %1070 = vmatprep.subr.mxu0 0.0
        %1071 = vmatpush1.msra.mxu0 0.0
        %1072 = vmatprep.subr.mxu0 0.0
        %1073 = vmatpush1.msra.mxu0 0.0
        %1074 = vmatprep.subr.mxu0 0.0
        %1075 = vmatpush1.msra.mxu0 0.0
        %1076 = vmatprep.subr.mxu0 0.0
        %1077 = vmatpush1.msra.mxu0 0.0
        %1078 = vmatprep.subr.mxu0 0.0
        %1079 = vmatpush1.msra.mxu0 0.0
        %1080 = vmatprep.subr.mxu0 0.0
        %1081 = vmatpush1.msra.mxu0 0.0
        %1082 = vmatprep.subr.mxu0 0.0
        %1083 = vmatpush1.msra.mxu0 0.0
        %1084 = vmatprep.subr.mxu0 0.0
        %1085 = vmatpush1.msra.mxu0 0.0
        %1086 = vmatprep.subr.mxu0 0.0
        %1087 = vmatpush1.msra.mxu0 0.0
        %1088 = vmatprep.subr.mxu0 0.0
        %1089 = vmatpush1.msra.mxu0 0.0
        %1090 = vmatprep.subr.mxu0 0.0
        %1091 = vmatpush1.msra.mxu0 0.0
        %1092 = vmatprep.subr.mxu0 0.0
        %1093 = vmatpush1.msra.mxu0 0.0
        %1094 = vmatprep.subr.mxu0 0.0
        %1095 = vmatpush1.msra.mxu0 0.0
        %1096 = vmatprep.subr.mxu0 0.0
        %1097 = vmatpush1.msra.mxu0 0.0
        %1098 = vmatprep.subr.mxu0 0.0
        %1099 = vmatpush1.msra.mxu0 0.0
        %1100 = vmatprep.subr.mxu0 0.0
        %1101 = vmatpush1.msra.mxu0 0.0
        %1102 = vmatprep.mubr.f32.mxu0 0.0
        %1103 = vmatmul.mubr.f32.gmra.mrb[0].mxu0 %v1027
        %v1104 = vpop.f32.mrb[0].mxu0
        %v1105 = vadd.f32 %v1008, %v1104
        %v1106 = vpop.f32.mrb[0].mxu0
        %1107 = vmatprep.mubr.f32.mxu0 0.0
        %1108 = vmatmul.mubr.f32.gmra.mrb[0].mxu0 %v1030
        %v1109 = vpop.f32.mrb[0].mxu0
        %v1110 = vadd.f32 %v1013, %v1109
        %v1111 = vpop.f32.mrb[0].mxu0
        %1112 = vmatprep.mubr.f32.mxu0 0.0
        %1113 = vmatmul.mubr.f32.gmra.mrb[0].mxu0 %v1033
        %v1114 = vpop.f32.mrb[0].mxu0
        %v1115 = vadd.f32 %v1018, %v1114
        %v1116 = vpop.f32.mrb[0].mxu0
        %1117 = vmatprep.mubr.f32.mxu0 0.0
        %1118 = vmatmul.mubr.f32.gmra.mrb[0].mxu0 %v1036
        %v1119 = vpop.f32.mrb[0].mxu0
        %v1120 = vadd.f32 %v1023, %v1119
        %v1121 = vpop.f32.mrb[0].mxu0
        %1122 = vdwg.mxu0
        %v1123 = vmax.f32 %v1105, 0.0
        %v1124 = vmax.f32 %v1110, 0.0
        %v1125 = vmax.f32 %v1115, 0.0
        %v1126 = vmax.f32 %v1120, 0.0
        %s1127 = scalar_lea.vmem %s6, 32
        %v1128 = vld [vmem:[%s1127] sm:$0xff]
        %v1129 = vld [vmem:[%s1127 + $0x8] sm:$0xff]
        %v1130 = vld [vmem:[%s1127 + $0x10] sm:$0xff]
        %v1131 = vld [vmem:[%s1127 + $0x18] sm:$0xff]
        %s1132 = scalar_lea.vmem %s7, 32
        %v1133 = vld [vmem:[%s1132] sm:$0xff]
        %v1134 = vld [vmem:[%s1132 + $0x8] sm:$0xff]
        %v1135 = vld [vmem:[%s1132 + $0x10] sm:$0xff]
        %v1136 = vld [vmem:[%s1132 + $0x18] sm:$0xff]
        %1138 = vset.pattern.permute.xlu0 0
        %1139 = vperm.xlu0 %1138, %v1133
        %v1140 = vpop.permute.xlu0 %1139
        %1143 = vset.pattern.permute.xlu0 0
        %1144 = vperm.xlu0 %1143, %v1134
        %v1145 = vpop.permute.xlu0 %1144
        %1148 = vset.pattern.permute.xlu0 0
        %1149 = vperm.xlu0 %1148, %v1135
        %v1150 = vpop.permute.xlu0 %1149
        %1153 = vset.pattern.permute.xlu0 0
        %1154 = vperm.xlu0 %1153, %v1136
        %v1155 = vpop.permute.xlu0 %1154
        %v1158 = vsel %vm1025, %v1128, 0
        %v1161 = vsel %vm1025, %v1129, 0
        %v1164 = vsel %vm1025, %v1130, 0
        %v1167 = vsel %vm1025, %v1131, 0
        %1169 = vmatprep.subr.mxu0 0.0
        %1170 = vmatpush1.msra.mxu0 %v1123
        %1171 = vmatprep.subr.mxu0 0.0
        %1172 = vmatpush1.msra.mxu0 %v1124
        %1173 = vmatprep.subr.mxu0 0.0
        %1174 = vmatpush1.msra.mxu0 %v1125
        %1175 = vmatprep.subr.mxu0 0.0
        %1176 = vmatpush1.msra.mxu0 %v1126
        %1177 = vmatprep.subr.mxu0 0.0
        %1178 = vmatpush1.msra.mxu0 0.0
        %1179 = vmatprep.subr.mxu0 0.0
        %1180 = vmatpush1.msra.mxu0 0.0
        %1181 = vmatprep.subr.mxu0 0.0
        %1182 = vmatpush1.msra.mxu0 0.0
        %1183 = vmatprep.subr.mxu0 0.0
        %1184 = vmatpush1.msra.mxu0 0.0
        %1185 = vmatprep.subr.mxu0 0.0
        %1186 = vmatpush1.msra.mxu0 0.0
        %1187 = vmatprep.subr.mxu0 0.0
        %1188 = vmatpush1.msra.mxu0 0.0
        %1189 = vmatprep.subr.mxu0 0.0
        %1190 = vmatpush1.msra.mxu0 0.0
        %1191 = vmatprep.subr.mxu0 0.0
        %1192 = vmatpush1.msra.mxu0 0.0
        %1193 = vmatprep.subr.mxu0 0.0
        %1194 = vmatpush1.msra.mxu0 0.0
        %1195 = vmatprep.subr.mxu0 0.0
        %1196 = vmatpush1.msra.mxu0 0.0
        %1197 = vmatprep.subr.mxu0 0.0
        %1198 = vmatpush1.msra.mxu0 0.0
        %1199 = vmatprep.subr.mxu0 0.0
        %1200 = vmatpush1.msra.mxu0 0.0
        %1201 = vmatprep.subr.mxu0 0.0
        %1202 = vmatpush1.msra.mxu0 0.0
        %1203 = vmatprep.subr.mxu0 0.0
        %1204 = vmatpush1.msra.mxu0 0.0
        %1205 = vmatprep.subr.mxu0 0.0
        %1206 = vmatpush1.msra.mxu0 0.0
        %1207 = vmatprep.subr.mxu0 0.0
        %1208 = vmatpush1.msra.mxu0 0.0
        %1209 = vmatprep.subr.mxu0 0.0
        %1210 = vmatpush1.msra.mxu0 0.0
        %1211 = vmatprep.subr.mxu0 0.0
        %1212 = vmatpush1.msra.mxu0 0.0
        %1213 = vmatprep.subr.mxu0 0.0
        %1214 = vmatpush1.msra.mxu0 0.0
        %1215 = vmatprep.subr.mxu0 0.0
        %1216 = vmatpush1.msra.mxu0 0.0
        %1217 = vmatprep.subr.mxu0 0.0
        %1218 = vmatpush1.msra.mxu0 0.0
        %1219 = vmatprep.subr.mxu0 0.0
        %1220 = vmatpush1.msra.mxu0 0.0
        %1221 = vmatprep.subr.mxu0 0.0
        %1222 = vmatpush1.msra.mxu0 0.0
        %1223 = vmatprep.subr.mxu0 0.0
        %1224 = vmatpush1.msra.mxu0 0.0
        %1225 = vmatprep.subr.mxu0 0.0
        %1226 = vmatpush1.msra.mxu0 0.0
        %1227 = vmatprep.subr.mxu0 0.0
        %1228 = vmatpush1.msra.mxu0 0.0
        %1229 = vmatprep.subr.mxu0 0.0
        %1230 = vmatpush1.msra.mxu0 0.0
        %1231 = vmatprep.subr.mxu0 0.0
        %1232 = vmatpush1.msra.mxu0 0.0
        %1233 = vmatprep.mubr.f32.mxu0 0.0
        %1234 = vmatmul.mubr.f32.gmra.mrb[0].mxu0 %v1158
        %v1235 = vpop.f32.mrb[0].mxu0
        %v1236 = vadd.f32 %v1140, %v1235
        %v1237 = vpop.f32.mrb[0].mxu0
        %1238 = vmatprep.mubr.f32.mxu0 0.0
        %1239 = vmatmul.mubr.f32.gmra.mrb[0].mxu0 %v1161
        %v1240 = vpop.f32.mrb[0].mxu0
        %v1241 = vadd.f32 %v1145, %v1240
        %v1242 = vpop.f32.mrb[0].mxu0
        %1243 = vmatprep.mubr.f32.mxu0 0.0
        %1244 = vmatmul.mubr.f32.gmra.mrb[0].mxu0 %v1164
        %v1245 = vpop.f32.mrb[0].mxu0
        %v1246 = vadd.f32 %v1150, %v1245
        %v1247 = vpop.f32.mrb[0].mxu0
        %1248 = vmatprep.mubr.f32.mxu0 0.0
        %1249 = vmatmul.mubr.f32.gmra.mrb[0].mxu0 %v1167
        %v1250 = vpop.f32.mrb[0].mxu0
        %v1251 = vadd.f32 %v1155, %v1250
        %v1252 = vpop.f32.mrb[0].mxu0
        %1253 = vdwg.mxu0
        %v1254 = vadd.f32 %v1236, %v1241
        %v1255 = vadd.f32 %v1254, %v1246
        %v1256 = vadd.f32 %v1255, %v1251
        %v1257 = vrot.slane %v1256, 4
        %v1258 = vadd.f32 %v1256, %v1257
        %v1259 = vrot.slane %v1258, 2
        %v1260 = vadd.f32 %v1258, %v1259
        %v1261 = vrot.slane %v1260, 1
        %v1262 = vadd.f32 %v1260, %v1261
        %v1263 = vmul.f32 %v1262, %v915
        %v1264 = vsub.f32 %v1236, %v1263
        %v1265 = vsub.f32 %v1241, %v1263
        %v1266 = vsub.f32 %v1246, %v1263
        %v1267 = vsub.f32 %v1251, %v1263
        %v1268 = vmul.f32 %v1264, %v1264
        %v1269 = vmul.f32 %v1265, %v1265
        %v1270 = vmul.f32 %v1266, %v1266
        %v1271 = vmul.f32 %v1267, %v1267
        %v1272 = vadd.f32 %v1268, %v1269
        %v1273 = vadd.f32 %v1272, %v1270
        %v1274 = vadd.f32 %v1273, %v1271
        %v1275 = vrot.slane %v1274, 4
        %v1276 = vadd.f32 %v1274, %v1275
        %v1277 = vrot.slane %v1276, 2
        %v1278 = vadd.f32 %v1276, %v1277
        %v1279 = vrot.slane %v1278, 1
        %v1280 = vadd.f32 %v1278, %v1279
        %v1281 = vmul.f32 %v1280, %v915
        %v1282 = vadd.f32 %v1281, 1e-05
        %v1283 = vrsqrt.pop %v1282
        %v1284 = vmul.f32 %v1264, %v1283
        %v1285 = vmul.f32 %v1265, %v1283
        %v1286 = vmul.f32 %v1266, %v1283
        %v1287 = vmul.f32 %v1267, %v1283
        %s1288 = scalar_lea.vmem %s10, 32
        %v1289 = vld [vmem:[%s1288] sm:$0xff]
        %v1290 = vld [vmem:[%s1288 + $0x8] sm:$0xff]
        %v1291 = vld [vmem:[%s1288 + $0x10] sm:$0xff]
        %v1292 = vld [vmem:[%s1288 + $0x18] sm:$0xff]
        %1294 = vset.pattern.permute.xlu0 0
        %1295 = vperm.xlu0 %1294, %v1289
        %v1296 = vpop.permute.xlu0 %1295
        %1299 = vset.pattern.permute.xlu0 0
        %1300 = vperm.xlu0 %1299, %v1290
        %v1301 = vpop.permute.xlu0 %1300
        %1304 = vset.pattern.permute.xlu0 0
        %1305 = vperm.xlu0 %1304, %v1291
        %v1306 = vpop.permute.xlu0 %1305
        %1309 = vset.pattern.permute.xlu0 0
        %1310 = vperm.xlu0 %1309, %v1292
        %v1311 = vpop.permute.xlu0 %1310
        %v1313 = vmul.f32 %v1284, %v1296
        %v1314 = vmul.f32 %v1285, %v1301
        %v1315 = vmul.f32 %v1286, %v1306
        %v1316 = vmul.f32 %v1287, %v1311
        %s1317 = scalar_lea.vmem %s11, 32
        %v1318 = vld [vmem:[%s1317] sm:$0xff]
        %v1319 = vld [vmem:[%s1317 + $0x8] sm:$0xff]
        %v1320 = vld [vmem:[%s1317 + $0x10] sm:$0xff]
        %v1321 = vld [vmem:[%s1317 + $0x18] sm:$0xff]
        %1323 = vset.pattern.permute.xlu0 0
        %1324 = vperm.xlu0 %1323, %v1318
        %v1325 = vpop.permute.xlu0 %1324
        %1328 = vset.pattern.permute.xlu0 0
        %1329 = vperm.xlu0 %1328, %v1319
        %v1330 = vpop.permute.xlu0 %1329
        %1333 = vset.pattern.permute.xlu0 0
        %1334 = vperm.xlu0 %1333, %v1320
        %v1335 = vpop.permute.xlu0 %1334
        %1338 = vset.pattern.permute.xlu0 0
        %1339 = vperm.xlu0 %1338, %v1321
        %v1340 = vpop.permute.xlu0 %1339
        %v1342 = vadd.f32 %v1313, %v1325
        %v1343 = vadd.f32 %v1314, %v1330
        %v1344 = vadd.f32 %v1315, %v1335
        %v1345 = vadd.f32 %v1316, %v1340
        %v1346 = vld [vmem:[%s8] sm:$0xff]
        %v1347 = vld [vmem:[%s8 + $0x8] sm:$0xff]
        %v1348 = vld [vmem:[%s8 + $0x10] sm:$0xff]
        %v1349 = vld [vmem:[%s8 + $0x18] sm:$0xff]
        %v1350 = vld [vmem:[%s8 + $0x20] sm:$0xff]
        %v1351 = vld [vmem:[%s8 + $0x28] sm:$0xff]
        %v1352 = vld [vmem:[%s8 + $0x30] sm:$0xff]
        %v1353 = vld [vmem:[%s8 + $0x38] sm:$0xff]
        %v1354 = vld [vmem:[%s9] sm:$0xff]
        %v1355 = vld [vmem:[%s9 + $0x8] sm:$0xff]
        %v1356 = vld [vmem:[%s9 + $0x10] sm:$0xff]
        %v1357 = vld [vmem:[%s9 + $0x18] sm:$0xff]
        %v1358 = vld [vmem:[%s9 + $0x20] sm:$0xff]
        %v1359 = vld [vmem:[%s9 + $0x28] sm:$0xff]
        %v1360 = vld [vmem:[%s9 + $0x30] sm:$0xff]
        %v1361 = vld [vmem:[%s9 + $0x38] sm:$0xff]
        %1363 = vset.pattern.permute.xlu0 0
        %1364 = vperm.xlu0 %1363, %v1354
        %v1365 = vpop.permute.xlu0 %1364
        %1368 = vset.pattern.permute.xlu0 0
        %1369 = vperm.xlu0 %1368, %v1355
        %v1370 = vpop.permute.xlu0 %1369
        %1373 = vset.pattern.permute.xlu0 0
        %1374 = vperm.xlu0 %1373, %v1356
        %v1375 = vpop.permute.xlu0 %1374
        %1378 = vset.pattern.permute.xlu0 0
        %1379 = vperm.xlu0 %1378, %v1357
        %v1380 = vpop.permute.xlu0 %1379
        %1383 = vset.pattern.permute.xlu0 0
        %1384 = vperm.xlu0 %1383, %v1358
        %v1385 = vpop.permute.xlu0 %1384
        %1388 = vset.pattern.permute.xlu0 0
        %1389 = vperm.xlu0 %1388, %v1359
        %v1390 = vpop.permute.xlu0 %1389
        %1393 = vset.pattern.permute.xlu0 0
        %1394 = vperm.xlu0 %1393, %v1360
        %v1395 = vpop.permute.xlu0 %1394
        %1398 = vset.pattern.permute.xlu0 0
        %1399 = vperm.xlu0 %1398, %v1361
        %v1400 = vpop.permute.xlu0 %1399
        %v1403 = vsel %vm1025, %v1346, 0
        %v1406 = vsel %vm1025, %v1347, 0
        %v1409 = vsel %vm1025, %v1348, 0
        %v1412 = vsel %vm1025, %v1349, 0
        %v1415 = vsel %vm1025, %v1350, 0
        %v1418 = vsel %vm1025, %v1351, 0
        %v1421 = vsel %vm1025, %v1352, 0
        %v1424 = vsel %vm1025, %v1353, 0
        %1426 = vmatprep.subr.mxu0 0.0
        %1427 = vmatpush1.msra.mxu0 %v1342
        %1428 = vmatprep.subr.mxu0 0.0
        %1429 = vmatpush1.msra.mxu0 %v1343
        %1430 = vmatprep.subr.mxu0 0.0
        %1431 = vmatpush1.msra.mxu0 %v1344
        %1432 = vmatprep.subr.mxu0 0.0
        %1433 = vmatpush1.msra.mxu0 %v1345
        %1434 = vmatprep.subr.mxu0 0.0
        %1435 = vmatpush1.msra.mxu0 0.0
        %1436 = vmatprep.subr.mxu0 0.0
        %1437 = vmatpush1.msra.mxu0 0.0
        %1438 = vmatprep.subr.mxu0 0.0
        %1439 = vmatpush1.msra.mxu0 0.0
        %1440 = vmatprep.subr.mxu0 0.0
        %1441 = vmatpush1.msra.mxu0 0.0
        %1442 = vmatprep.subr.mxu0 0.0
        %1443 = vmatpush1.msra.mxu0 0.0
        %1444 = vmatprep.subr.mxu0 0.0
        %1445 = vmatpush1.msra.mxu0 0.0
        %1446 = vmatprep.subr.mxu0 0.0
        %1447 = vmatpush1.msra.mxu0 0.0
        %1448 = vmatprep.subr.mxu0 0.0
        %1449 = vmatpush1.msra.mxu0 0.0
        %1450 = vmatprep.subr.mxu0 0.0
        %1451 = vmatpush1.msra.mxu0 0.0
        %1452 = vmatprep.subr.mxu0 0.0
        %1453 = vmatpush1.msra.mxu0 0.0
        %1454 = vmatprep.subr.mxu0 0.0
        %1455 = vmatpush1.msra.mxu0 0.0
        %1456 = vmatprep.subr.mxu0 0.0
        %1457 = vmatpush1.msra.mxu0 0.0
        %1458 = vmatprep.subr.mxu0 0.0
        %1459 = vmatpush1.msra.mxu0 0.0
        %1460 = vmatprep.subr.mxu0 0.0
        %1461 = vmatpush1.msra.mxu0 0.0
        %1462 = vmatprep.subr.mxu0 0.0
        %1463 = vmatpush1.msra.mxu0 0.0
        %1464 = vmatprep.subr.mxu0 0.0
        %1465 = vmatpush1.msra.mxu0 0.0
        %1466 = vmatprep.subr.mxu0 0.0
        %1467 = vmatpush1.msra.mxu0 0.0
        %1468 = vmatprep.subr.mxu0 0.0
        %1469 = vmatpush1.msra.mxu0 0.0
        %1470 = vmatprep.subr.mxu0 0.0
        %1471 = vmatpush1.msra.mxu0 0.0
        %1472 = vmatprep.subr.mxu0 0.0
        %1473 = vmatpush1.msra.mxu0 0.0
        %1474 = vmatprep.subr.mxu0 0.0
        %1475 = vmatpush1.msra.mxu0 0.0
        %1476 = vmatprep.subr.mxu0 0.0
        %1477 = vmatpush1.msra.mxu0 0.0
        %1478 = vmatprep.subr.mxu0 0.0
        %1479 = vmatpush1.msra.mxu0 0.0
        %1480 = vmatprep.subr.mxu0 0.0
        %1481 = vmatpush1.msra.mxu0 0.0
        %1482 = vmatprep.subr.mxu0 0.0
        %1483 = vmatpush1.msra.mxu0 0.0
        %1484 = vmatprep.subr.mxu0 0.0
        %1485 = vmatpush1.msra.mxu0 0.0
        %1486 = vmatprep.subr.mxu0 0.0
        %1487 = vmatpush1.msra.mxu0 0.0
        %1488 = vmatprep.subr.mxu0 0.0
        %1489 = vmatpush1.msra.mxu0 0.0
        %1490 = vmatprep.mubr.f32.mxu0 0.0
        %1491 = vmatmul.mubr.f32.gmra.mrb[0].mxu0 %v1403
        %v1492 = vpop.f32.mrb[0].mxu0
        %v1493 = vadd.f32 %v1365, %v1492
        %v1494 = vpop.f32.mrb[0].mxu0
        %1495 = vmatprep.mubr.f32.mxu0 0.0
        %1496 = vmatmul.mubr.f32.gmra.mrb[0].mxu0 %v1406
        %v1497 = vpop.f32.mrb[0].mxu0
        %v1498 = vadd.f32 %v1370, %v1497
        %v1499 = vpop.f32.mrb[0].mxu0
        %1500 = vmatprep.mubr.f32.mxu0 0.0
        %1501 = vmatmul.mubr.f32.gmra.mrb[0].mxu0 %v1409
        %v1502 = vpop.f32.mrb[0].mxu0
        %v1503 = vadd.f32 %v1375, %v1502
        %v1504 = vpop.f32.mrb[0].mxu0
        %1505 = vmatprep.mubr.f32.mxu0 0.0
        %1506 = vmatmul.mubr.f32.gmra.mrb[0].mxu0 %v1412
        %v1507 = vpop.f32.mrb[0].mxu0
        %v1508 = vadd.f32 %v1380, %v1507
        %v1509 = vpop.f32.mrb[0].mxu0
        %1510 = vmatprep.mubr.f32.mxu0 0.0
        %1511 = vmatmul.mubr.f32.gmra.mrb[0].mxu0 %v1415
        %v1512 = vpop.f32.mrb[0].mxu0
        %v1513 = vadd.f32 %v1385, %v1512
        %v1514 = vpop.f32.mrb[0].mxu0
        %1515 = vmatprep.mubr.f32.mxu0 0.0
        %1516 = vmatmul.mubr.f32.gmra.mrb[0].mxu0 %v1418
        %v1517 = vpop.f32.mrb[0].mxu0
        %v1518 = vadd.f32 %v1390, %v1517
        %v1519 = vpop.f32.mrb[0].mxu0
        %1520 = vmatprep.mubr.f32.mxu0 0.0
        %1521 = vmatmul.mubr.f32.gmra.mrb[0].mxu0 %v1421
        %v1522 = vpop.f32.mrb[0].mxu0
        %v1523 = vadd.f32 %v1395, %v1522
        %v1524 = vpop.f32.mrb[0].mxu0
        %1525 = vmatprep.mubr.f32.mxu0 0.0
        %1526 = vmatmul.mubr.f32.gmra.mrb[0].mxu0 %v1424
        %v1527 = vpop.f32.mrb[0].mxu0
        %v1528 = vadd.f32 %v1400, %v1527
        %v1529 = vpop.f32.mrb[0].mxu0
        %1530 = vdwg.mxu0
        %v1531 = vld [vmem:[%s16] sm:$0xff]
        %v1532 = vld [vmem:[%s16 + $0x8] sm:$0x3]
        %v1533 = vsel %vm1025, %v1531, 0.0
        %1534 = vadd.xlane.f32.xlu0 %v1533
        %v1535 = vpop.xlane.xlu0 %1534
        %vm1536 = vcmask 254976
        %v1537 = vsel %vm1536, %v1532, 0.0
        %1538 = vadd.xlane.f32.xlu0 %v1537
        %v1539 = vpop.xlane.xlu0 %1538
        %v1540 = vmul.f32 %v1535, %v915
        %v1541 = vmul.f32 %v1539, %v915
        %v1542 = vsub.f32 %v1531, %v1540
        %v1543 = vsub.f32 %v1532, %v1541
        %v1544 = vmul.f32 %v1542, %v1542
        %v1545 = vmul.f32 %v1543, %v1543
        %v1546 = vsel %vm1025, %v1544, 0.0
        %1547 = vadd.xlane.f32.xlu0 %v1546
        %v1548 = vpop.xlane.xlu0 %1547
        %v1549 = vsel %vm1536, %v1545, 0.0
        %1550 = vadd.xlane.f32.xlu0 %v1549
        %v1551 = vpop.xlane.xlu0 %1550
        %v1552 = vmul.f32 %v1548, %v915
        %v1553 = vmul.f32 %v1551, %v915
        %v1554 = vadd.f32 %v1552, 1e-05
        %v1555 = vadd.f32 %v1553, 1e-05
        %v1556 = vrsqrt.pop %v1554
        %v1557 = vrsqrt.pop %v1555
        %v1558 = vmul.f32 %v1542, %v1556
        %v1559 = vmul.f32 %v1543, %v1557
        %v1560 = vld [vmem:[%s14] sm:$0x1]
        %v1562 = vlaneseq
        %v1563 = vshrl.u32 %v1562, 7
        %v1564 = vsub.s32 0, %v1563
        %v1565 = vrot.slane %v1560, %v1564
        %v1567 = vmul.f32 %v1558, %v1565
        %v1568 = vmul.f32 %v1559, %v1565
        %v1569 = vld [vmem:[%s15] sm:$0x1]
        %v1571 = vlaneseq
        %v1572 = vshrl.u32 %v1571, 7
        %v1573 = vsub.s32 0, %v1572
        %v1574 = vrot.slane %v1569, %v1573
        %v1576 = vadd.f32 %v1567, %v1574
        %v1577 = vadd.f32 %v1568, %v1574
        %v1578 = vld [vmem:[%s12] sm:$0xff]
        %v1579 = vld [vmem:[%s12 + $0x8] sm:$0xff]
        %v1580 = vld [vmem:[%s12 + $0x10] sm:$0xff]
        %v1581 = vld [vmem:[%s12 + $0x18] sm:$0xff]
        %v1582 = vld [vmem:[%s13] sm:$0x1]
        %v1584 = vlaneseq
        %v1585 = vshrl.u32 %v1584, 7
        %v1586 = vsub.s32 0, %v1585
        %v1587 = vrot.slane %v1582, %v1586
        %v1590 = vsel %vm1025, %v1576, 0
        %v1593 = vsel %vm1025, %v1577, 0
        %1595 = vmatprep.subr.mxu0 0.0
        %1596 = vmatpush1.msra.mxu0 %v1578
        %1597 = vmatprep.subr.mxu0 0.0
        %1598 = vmatpush1.msra.mxu0 %v1579
        %1599 = vmatprep.subr.mxu0 0.0
        %1600 = vmatpush1.msra.mxu0 %v1580
        %1601 = vmatprep.subr.mxu0 0.0
        %1602 = vmatpush1.msra.mxu0 %v1581
        %1603 = vmatprep.subr.mxu0 0.0
        %1604 = vmatpush1.msra.mxu0 0.0
        %1605 = vmatprep.subr.mxu0 0.0
        %1606 = vmatpush1.msra.mxu0 0.0
        %1607 = vmatprep.subr.mxu0 0.0
        %1608 = vmatpush1.msra.mxu0 0.0
        %1609 = vmatprep.subr.mxu0 0.0
        %1610 = vmatpush1.msra.mxu0 0.0
        %1611 = vmatprep.subr.mxu0 0.0
        %1612 = vmatpush1.msra.mxu0 0.0
        %1613 = vmatprep.subr.mxu0 0.0
        %1614 = vmatpush1.msra.mxu0 0.0
        %1615 = vmatprep.subr.mxu0 0.0
        %1616 = vmatpush1.msra.mxu0 0.0
        %1617 = vmatprep.subr.mxu0 0.0
        %1618 = vmatpush1.msra.mxu0 0.0
        %1619 = vmatprep.subr.mxu0 0.0
        %1620 = vmatpush1.msra.mxu0 0.0
        %1621 = vmatprep.subr.mxu0 0.0
        %1622 = vmatpush1.msra.mxu0 0.0
        %1623 = vmatprep.subr.mxu0 0.0
        %1624 = vmatpush1.msra.mxu0 0.0
        %1625 = vmatprep.subr.mxu0 0.0
        %1626 = vmatpush1.msra.mxu0 0.0
        %1627 = vmatprep.subr.mxu0 0.0
        %1628 = vmatpush1.msra.mxu0 0.0
        %1629 = vmatprep.subr.mxu0 0.0
        %1630 = vmatpush1.msra.mxu0 0.0
        %1631 = vmatprep.subr.mxu0 0.0
        %1632 = vmatpush1.msra.mxu0 0.0
        %1633 = vmatprep.subr.mxu0 0.0
        %1634 = vmatpush1.msra.mxu0 0.0
        %1635 = vmatprep.subr.mxu0 0.0
        %1636 = vmatpush1.msra.mxu0 0.0
        %1637 = vmatprep.subr.mxu0 0.0
        %1638 = vmatpush1.msra.mxu0 0.0
        %1639 = vmatprep.subr.mxu0 0.0
        %1640 = vmatpush1.msra.mxu0 0.0
        %1641 = vmatprep.subr.mxu0 0.0
        %1642 = vmatpush1.msra.mxu0 0.0
        %1643 = vmatprep.subr.mxu0 0.0
        %1644 = vmatpush1.msra.mxu0 0.0
        %1645 = vmatprep.subr.mxu0 0.0
        %1646 = vmatpush1.msra.mxu0 0.0
        %1647 = vmatprep.subr.mxu0 0.0
        %1648 = vmatpush1.msra.mxu0 0.0
        %1649 = vmatprep.subr.mxu0 0.0
        %1650 = vmatpush1.msra.mxu0 0.0
        %1651 = vmatprep.subr.mxu0 0.0
        %1652 = vmatpush1.msra.mxu0 0.0
        %1653 = vmatprep.subr.mxu0 0.0
        %1654 = vmatpush1.msra.mxu0 0.0
        %1655 = vmatprep.subr.mxu0 0.0
        %1656 = vmatpush1.msra.mxu0 0.0
        %1657 = vmatprep.subr.mxu0 0.0
        %1658 = vmatpush1.msra.mxu0 0.0
        %1659 = vmatprep.mubr.f32.mxu0 0.0
        %1660 = vmatmul.mubr.f32.gmra.mrb[0].mxu0 %v1590
        %v1661 = vpop.f32.mrb[0].mxu0
        %v1662 = vadd.f32 %v1587, %v1661
        %v1663 = vpop.f32.mrb[0].mxu0
        %1664 = vmatprep.mubr.f32.mxu0 0.0
        %1665 = vmatmul.mubr.f32.gmra.mrb[0].mxu0 %v1593
        %v1666 = vpop.f32.mrb[0].mxu0
        %v1667 = vadd.f32 %v1587, %v1666
        %v1668 = vpop.f32.mrb[0].mxu0
        %1669 = vdwg.mxu0
        %v1671 = vsel %vm1025, %v1662, 0
        %v1674 = vsel %vm1025, %v1667, 0
        %1676 = vmatprep.subr.mxu0 0.0
        %1677 = vmatpush1.msra.mxu0 %v1493
        %1678 = vmatprep.subr.mxu0 0.0
        %1679 = vmatpush1.msra.mxu0 %v1498
        %1680 = vmatprep.subr.mxu0 0.0
        %1681 = vmatpush1.msra.mxu0 %v1503
        %1682 = vmatprep.subr.mxu0 0.0
        %1683 = vmatpush1.msra.mxu0 %v1508
        %1684 = vmatprep.subr.mxu0 0.0
        %1685 = vmatpush1.msra.mxu0 0.0
        %1686 = vmatprep.subr.mxu0 0.0
        %1687 = vmatpush1.msra.mxu0 0.0
        %1688 = vmatprep.subr.mxu0 0.0
        %1689 = vmatpush1.msra.mxu0 0.0
        %1690 = vmatprep.subr.mxu0 0.0
        %1691 = vmatpush1.msra.mxu0 0.0
        %1692 = vmatprep.subr.mxu0 0.0
        %1693 = vmatpush1.msra.mxu0 0.0
        %1694 = vmatprep.subr.mxu0 0.0
        %1695 = vmatpush1.msra.mxu0 0.0
        %1696 = vmatprep.subr.mxu0 0.0
        %1697 = vmatpush1.msra.mxu0 0.0
        %1698 = vmatprep.subr.mxu0 0.0
        %1699 = vmatpush1.msra.mxu0 0.0
        %1700 = vmatprep.subr.mxu0 0.0
        %1701 = vmatpush1.msra.mxu0 0.0
        %1702 = vmatprep.subr.mxu0 0.0
        %1703 = vmatpush1.msra.mxu0 0.0
        %1704 = vmatprep.subr.mxu0 0.0
        %1705 = vmatpush1.msra.mxu0 0.0
        %1706 = vmatprep.subr.mxu0 0.0
        %1707 = vmatpush1.msra.mxu0 0.0
        %1708 = vmatprep.subr.mxu0 0.0
        %1709 = vmatpush1.msra.mxu0 0.0
        %1710 = vmatprep.subr.mxu0 0.0
        %1711 = vmatpush1.msra.mxu0 0.0
        %1712 = vmatprep.subr.mxu0 0.0
        %1713 = vmatpush1.msra.mxu0 0.0
        %1714 = vmatprep.subr.mxu0 0.0
        %1715 = vmatpush1.msra.mxu0 0.0
        %1716 = vmatprep.subr.mxu0 0.0
        %1717 = vmatpush1.msra.mxu0 0.0
        %1718 = vmatprep.subr.mxu0 0.0
        %1719 = vmatpush1.msra.mxu0 0.0
        %1720 = vmatprep.subr.mxu0 0.0
        %1721 = vmatpush1.msra.mxu0 0.0
        %1722 = vmatprep.subr.mxu0 0.0
        %1723 = vmatpush1.msra.mxu0 0.0
        %1724 = vmatprep.subr.mxu0 0.0
        %1725 = vmatpush1.msra.mxu0 0.0
        %1726 = vmatprep.subr.mxu0 0.0
        %1727 = vmatpush1.msra.mxu0 0.0
        %1728 = vmatprep.subr.mxu0 0.0
        %1729 = vmatpush1.msra.mxu0 0.0
        %1730 = vmatprep.subr.mxu0 0.0
        %1731 = vmatpush1.msra.mxu0 0.0
        %1732 = vmatprep.subr.mxu0 0.0
        %1733 = vmatpush1.msra.mxu0 0.0
        %1734 = vmatprep.subr.mxu0 0.0
        %1735 = vmatpush1.msra.mxu0 0.0
        %1736 = vmatprep.subr.mxu0 0.0
        %1737 = vmatpush1.msra.mxu0 0.0
        %1738 = vmatprep.subr.mxu0 0.0
        %1739 = vmatpush1.msra.mxu0 0.0
        %1740 = vmatprep.mubr.f32.mxu0 0.0
        %1741 = vmatmul.mubr.f32.gmra.mrb[0].mxu0 %v1671
        %v1742 = vpop.f32.mrb[0].mxu0
        %v1743 = vadd.f32 0.0, %v1742
        %v1744 = vpop.f32.mrb[0].mxu0
        %1745 = vmatprep.mubr.f32.mxu0 0.0
        %1746 = vmatmul.mubr.f32.gmra.mrb[0].mxu0 %v1674
        %v1747 = vpop.f32.mrb[0].mxu0
        %v1748 = vadd.f32 0.0, %v1747
        %v1749 = vpop.f32.mrb[0].mxu0
        %1750 = vdwg.mxu0
        %v1751 = vmul.f32 %v1743, 0.17677669
        %v1752 = vmul.f32 %v1748, 0.17677669
        %vm1753 = vcmask 1041408
        %v1754 = vsel %vm1753, %v1752, -inf
        %v1755 = vmax.f32 %v1751, %v1754
        %v1756 = vrot.slane %v1755, 4
        %v1757 = vmax.f32 %v1755, %v1756
        %v1758 = vrot.slane %v1757, 2
        %v1759 = vmax.f32 %v1757, %v1758
        %v1760 = vrot.slane %v1759, 1
        %v1761 = vmax.f32 %v1759, %v1760
        %v1762 = vsub.f32 %v1751, %v1761
        %v1763 = vsub.f32 %v1752, %v1761
        %v1764 = vmul.f32 %v1762, 1.442695
        %v1765 = vpow.pop %v1764
        %v1766 = vmul.f32 %v1763, 1.442695
        %v1767 = vpow.pop %v1766
        %v1768 = vsel %vm1753, %v1767, 0.0
        %v1769 = vadd.f32 %v1765, %v1768
        %v1770 = vrot.slane %v1769, 4
        %v1771 = vadd.f32 %v1769, %v1770
        %v1772 = vrot.slane %v1771, 2
        %v1773 = vadd.f32 %v1771, %v1772
        %v1774 = vrot.slane %v1773, 1
        %v1775 = vadd.f32 %v1773, %v1774
        %v1776 = vrcp.pop %v1775
        %v1777 = vmul.f32 %v1765, %v1776
        %v1778 = vmul.f32 %v1767, %v1776
        %v1779 = vadd.f32 %v1777, 1e-08
        %v1780 = vadd.f32 %v1778, 1e-08
        %1781 = vst [vmem:[%s639] sm:$0xff] %v1779
        %1782 = vst [vmem:[%s639 + $0x8] sm:$0x3] %v1780
        %1783 = vadd.xlane.f32.xlu0 %v1779
        %v1784 = vpop.xlane.xlu0 %1783
        %v1785 = vsel %vm1753, %v1780, 0.0
        %1786 = vadd.xlane.f32.xlu0 %v1785
        %v1787 = vpop.xlane.xlu0 %1786
        %v1788 = vrcp.pop %v1784
        %v1789 = vrcp.pop %v1787
        %v1790 = vmul.f32 %v1779, %v1788
        %v1791 = vmul.f32 %v1780, %v1789
        %1792 = vmatprep.subr.mxu0 0.0
        %1793 = vmatpush1.xpose.msra.mxu0 %v1513
        %1794 = vmatprep.subr.mxu0 0.0
        %1795 = vmatpush1.xpose.msra.mxu0 %v1518
        %1796 = vmatprep.subr.mxu0 0.0
        %1797 = vmatpush1.xpose.msra.mxu0 %v1523
        %1798 = vmatprep.subr.mxu0 0.0
        %1799 = vmatpush1.xpose.msra.mxu0 %v1528
        %1800 = vmatprep.subr.mxu0 0.0
        %1801 = vmatpush1.xpose.msra.mxu0 0.0
        %1802 = vmatprep.subr.mxu0 0.0
        %1803 = vmatpush1.xpose.msra.mxu0 0.0
        %1804 = vmatprep.subr.mxu0 0.0
        %1805 = vmatpush1.xpose.msra.mxu0 0.0
        %1806 = vmatprep.subr.mxu0 0.0
        %1807 = vmatpush1.xpose.msra.mxu0 0.0
        %1808 = vmatprep.subr.mxu0 0.0
        %1809 = vmatpush1.xpose.msra.mxu0 0.0
        %1810 = vmatprep.subr.mxu0 0.0
        %1811 = vmatpush1.xpose.msra.mxu0 0.0
        %1812 = vmatprep.subr.mxu0 0.0
        %1813 = vmatpush1.xpose.msra.mxu0 0.0
        %1814 = vmatprep.subr.mxu0 0.0
        %1815 = vmatpush1.xpose.msra.mxu0 0.0
        %1816 = vmatprep.subr.mxu0 0.0
        %1817 = vmatpush1.xpose.msra.mxu0 0.0
        %1818 = vmatprep.subr.mxu0 0.0
        %1819 = vmatpush1.xpose.msra.mxu0 0.0
        %1820 = vmatprep.subr.mxu0 0.0
        %1821 = vmatpush1.xpose.msra.mxu0 0.0
        %1822 = vmatprep.subr.mxu0 0.0
        %1823 = vmatpush1.xpose.msra.mxu0 0.0
        %1824 = vmatprep.subr.mxu0 0.0
        %1825 = vmatpush1.xpose.msra.mxu0 0.0
        %1826 = vmatprep.subr.mxu0 0.0
        %1827 = vmatpush1.xpose.msra.mxu0 0.0
        %1828 = vmatprep.subr.mxu0 0.0
        %1829 = vmatpush1.xpose.msra.mxu0 0.0
        %1830 = vmatprep.subr.mxu0 0.0
        %1831 = vmatpush1.xpose.msra.mxu0 0.0
        %1832 = vmatprep.subr.mxu0 0.0
        %1833 = vmatpush1.xpose.msra.mxu0 0.0
        %1834 = vmatprep.subr.mxu0 0.0
        %1835 = vmatpush1.xpose.msra.mxu0 0.0
        %1836 = vmatprep.subr.mxu0 0.0
        %1837 = vmatpush1.xpose.msra.mxu0 0.0
        %1838 = vmatprep.subr.mxu0 0.0
        %1839 = vmatpush1.xpose.msra.mxu0 0.0
        %1840 = vmatprep.subr.mxu0 0.0
        %1841 = vmatpush1.xpose.msra.mxu0 0.0
        %1842 = vmatprep.subr.mxu0 0.0
        %1843 = vmatpush1.xpose.msra.mxu0 0.0
        %1844 = vmatprep.subr.mxu0 0.0
        %1845 = vmatpush1.xpose.msra.mxu0 0.0
        %1846 = vmatprep.subr.mxu0 0.0
        %1847 = vmatpush1.xpose.msra.mxu0 0.0
        %1848 = vmatprep.subr.mxu0 0.0
        %1849 = vmatpush1.xpose.msra.mxu0 0.0
        %1850 = vmatprep.subr.mxu0 0.0
        %1851 = vmatpush1.xpose.msra.mxu0 0.0
        %1852 = vmatprep.subr.mxu0 0.0
        %1853 = vmatpush1.xpose.msra.mxu0 0.0
        %1854 = vmatprep.subr.mxu0 0.0
        %1855 = vmatpush1.xpose.msra.mxu0 0.0
        %1856 = vmatprep.mubr.f32.mxu0 0.0
        %1857 = vmatmul.mubr.f32.gmra.mrb[0].mxu0 %v1790
        %v1858 = vpop.f32.mrb[0].mxu0
        %v1859 = vadd.f32 0.0, %v1858
        %v1860 = vpop.f32.mrb[0].mxu0
        %1861 = vmatprep.mubr.f32.mxu0 0.0
        %1862 = vmatmul.mubr.f32.gmra.mrb[0].mxu0 %v1791
        %v1863 = vpop.f32.mrb[0].mxu0
        %v1864 = vpop.f32.mrb[0].mxu0
        %1865 = vdwg.mxu0
        %v1866 = vsel %vm1025, %v1859, 0.0
        %1867 = vadd.xlane.f32.xlu0 %v1866
        %v1868 = vpop.xlane.xlu0 %1867
        %v1869 = vmul.f32 %v1868, %v915
        %v1870 = vsub.f32 %v1859, %v1869
        %v1871 = vmul.f32 %v1870, %v1870
        %v1872 = vsel %vm1025, %v1871, 0.0
        %1873 = vadd.xlane.f32.xlu0 %v1872
        %v1874 = vpop.xlane.xlu0 %1873
        %v1875 = vmul.f32 %v1874, %v915
        %v1876 = vadd.f32 %v1875, 1e-05
        %v1877 = vrsqrt.pop %v1876
        %v1878 = vmul.f32 %v1870, %v1877
        %s1879 = scalar_lea.vmem %s14, 1
        %v1880 = vld [vmem:[%s1879] sm:$0x1]
        %v1882 = vlaneseq
        %v1883 = vshrl.u32 %v1882, 7
        %v1884 = vsub.s32 0, %v1883
        %v1885 = vrot.slane %v1880, %v1884
        %v1887 = vmul.f32 %v1878, %v1885
        %s1888 = scalar_lea.vmem %s15, 1
        %v1889 = vld [vmem:[%s1888] sm:$0x1]
        %v1891 = vlaneseq
        %v1892 = vshrl.u32 %v1891, 7
        %v1893 = vsub.s32 0, %v1892
        %v1894 = vrot.slane %v1889, %v1893
        %v1896 = vadd.f32 %v1887, %v1894
        %s1897 = scalar_lea.vmem %s12, 32
        %v1898 = vld [vmem:[%s1897] sm:$0xff]
        %v1899 = vld [vmem:[%s1897 + $0x8] sm:$0xff]
        %v1900 = vld [vmem:[%s1897 + $0x10] sm:$0xff]
        %v1901 = vld [vmem:[%s1897 + $0x18] sm:$0xff]
        %s1902 = scalar_lea.vmem %s13, 1
        %v1903 = vld [vmem:[%s1902] sm:$0x1]
        %v1905 = vlaneseq
        %v1906 = vshrl.u32 %v1905, 7
        %v1907 = vsub.s32 0, %v1906
        %v1908 = vrot.slane %v1903, %v1907
        %v1911 = vsel %vm1025, %v1896, 0
        %1913 = vmatprep.subr.mxu0 0.0
        %1914 = vmatpush1.msra.mxu0 %v1898
        %1915 = vmatprep.subr.mxu0 0.0
        %1916 = vmatpush1.msra.mxu0 %v1899
        %1917 = vmatprep.subr.mxu0 0.0
        %1918 = vmatpush1.msra.mxu0 %v1900
        %1919 = vmatprep.subr.mxu0 0.0
        %1920 = vmatpush1.msra.mxu0 %v1901
        %1921 = vmatprep.subr.mxu0 0.0
        %1922 = vmatpush1.msra.mxu0 0.0
        %1923 = vmatprep.subr.mxu0 0.0
        %1924 = vmatpush1.msra.mxu0 0.0
        %1925 = vmatprep.subr.mxu0 0.0
        %1926 = vmatpush1.msra.mxu0 0.0
        %1927 = vmatprep.subr.mxu0 0.0
        %1928 = vmatpush1.msra.mxu0 0.0
        %1929 = vmatprep.subr.mxu0 0.0
        %1930 = vmatpush1.msra.mxu0 0.0
        %1931 = vmatprep.subr.mxu0 0.0
        %1932 = vmatpush1.msra.mxu0 0.0
        %1933 = vmatprep.subr.mxu0 0.0
        %1934 = vmatpush1.msra.mxu0 0.0
        %1935 = vmatprep.subr.mxu0 0.0
        %1936 = vmatpush1.msra.mxu0 0.0
        %1937 = vmatprep.subr.mxu0 0.0
        %1938 = vmatpush1.msra.mxu0 0.0
        %1939 = vmatprep.subr.mxu0 0.0
        %1940 = vmatpush1.msra.mxu0 0.0
        %1941 = vmatprep.subr.mxu0 0.0
        %1942 = vmatpush1.msra.mxu0 0.0
        %1943 = vmatprep.subr.mxu0 0.0
        %1944 = vmatpush1.msra.mxu0 0.0
        %1945 = vmatprep.subr.mxu0 0.0
        %1946 = vmatpush1.msra.mxu0 0.0
        %1947 = vmatprep.subr.mxu0 0.0
        %1948 = vmatpush1.msra.mxu0 0.0
        %1949 = vmatprep.subr.mxu0 0.0
        %1950 = vmatpush1.msra.mxu0 0.0
        %1951 = vmatprep.subr.mxu0 0.0
        %1952 = vmatpush1.msra.mxu0 0.0
        %1953 = vmatprep.subr.mxu0 0.0
        %1954 = vmatpush1.msra.mxu0 0.0
        %1955 = vmatprep.subr.mxu0 0.0
        %1956 = vmatpush1.msra.mxu0 0.0
        %1957 = vmatprep.subr.mxu0 0.0
        %1958 = vmatpush1.msra.mxu0 0.0
        %1959 = vmatprep.subr.mxu0 0.0
        %1960 = vmatpush1.msra.mxu0 0.0
        %1961 = vmatprep.subr.mxu0 0.0
        %1962 = vmatpush1.msra.mxu0 0.0
        %1963 = vmatprep.subr.mxu0 0.0
        %1964 = vmatpush1.msra.mxu0 0.0
        %1965 = vmatprep.subr.mxu0 0.0
        %1966 = vmatpush1.msra.mxu0 0.0
        %1967 = vmatprep.subr.mxu0 0.0
        %1968 = vmatpush1.msra.mxu0 0.0
        %1969 = vmatprep.subr.mxu0 0.0
        %1970 = vmatpush1.msra.mxu0 0.0
        %1971 = vmatprep.subr.mxu0 0.0
        %1972 = vmatpush1.msra.mxu0 0.0
        %1973 = vmatprep.subr.mxu0 0.0
        %1974 = vmatpush1.msra.mxu0 0.0
        %1975 = vmatprep.subr.mxu0 0.0
        %1976 = vmatpush1.msra.mxu0 0.0
        %1977 = vmatprep.mubr.f32.mxu0 0.0
        %1978 = vmatmul.mubr.f32.gmra.mrb[0].mxu0 %v1911
        %v1979 = vpop.f32.mrb[0].mxu0
        %v1980 = vadd.f32 %v1908, %v1979
        %v1981 = vpop.f32.mrb[0].mxu0
        %1982 = vdwg.mxu0
        %v1983 = vmax.f32 %v1980, 0.0
        %s1984 = scalar_lea.vmem %s12, 64
        %v1985 = vld [vmem:[%s1984] sm:$0xff]
        %v1986 = vld [vmem:[%s1984 + $0x8] sm:$0xff]
        %v1987 = vld [vmem:[%s1984 + $0x10] sm:$0xff]
        %v1988 = vld [vmem:[%s1984 + $0x18] sm:$0xff]
        %s1989 = scalar_lea.vmem %s13, 2
        %v1990 = vld [vmem:[%s1989] sm:$0x1]
        %v1992 = vlaneseq
        %v1993 = vshrl.u32 %v1992, 7
        %v1994 = vsub.s32 0, %v1993
        %v1995 = vrot.slane %v1990, %v1994
        %v1998 = vsel %vm1025, %v1983, 0
        %2000 = vmatprep.subr.mxu0 0.0
        %2001 = vmatpush1.msra.mxu0 %v1985
        %2002 = vmatprep.subr.mxu0 0.0
        %2003 = vmatpush1.msra.mxu0 %v1986
        %2004 = vmatprep.subr.mxu0 0.0
        %2005 = vmatpush1.msra.mxu0 %v1987
        %2006 = vmatprep.subr.mxu0 0.0
        %2007 = vmatpush1.msra.mxu0 %v1988
        %2008 = vmatprep.subr.mxu0 0.0
        %2009 = vmatpush1.msra.mxu0 0.0
        %2010 = vmatprep.subr.mxu0 0.0
        %2011 = vmatpush1.msra.mxu0 0.0
        %2012 = vmatprep.subr.mxu0 0.0
        %2013 = vmatpush1.msra.mxu0 0.0
        %2014 = vmatprep.subr.mxu0 0.0
        %2015 = vmatpush1.msra.mxu0 0.0
        %2016 = vmatprep.subr.mxu0 0.0
        %2017 = vmatpush1.msra.mxu0 0.0
        %2018 = vmatprep.subr.mxu0 0.0
        %2019 = vmatpush1.msra.mxu0 0.0
        %2020 = vmatprep.subr.mxu0 0.0
        %2021 = vmatpush1.msra.mxu0 0.0
        %2022 = vmatprep.subr.mxu0 0.0
        %2023 = vmatpush1.msra.mxu0 0.0
        %2024 = vmatprep.subr.mxu0 0.0
        %2025 = vmatpush1.msra.mxu0 0.0
        %2026 = vmatprep.subr.mxu0 0.0
        %2027 = vmatpush1.msra.mxu0 0.0
        %2028 = vmatprep.subr.mxu0 0.0
        %2029 = vmatpush1.msra.mxu0 0.0
        %2030 = vmatprep.subr.mxu0 0.0
        %2031 = vmatpush1.msra.mxu0 0.0
        %2032 = vmatprep.subr.mxu0 0.0
        %2033 = vmatpush1.msra.mxu0 0.0
        %2034 = vmatprep.subr.mxu0 0.0
        %2035 = vmatpush1.msra.mxu0 0.0
        %2036 = vmatprep.subr.mxu0 0.0
        %2037 = vmatpush1.msra.mxu0 0.0
        %2038 = vmatprep.subr.mxu0 0.0
        %2039 = vmatpush1.msra.mxu0 0.0
        %2040 = vmatprep.subr.mxu0 0.0
        %2041 = vmatpush1.msra.mxu0 0.0
        %2042 = vmatprep.subr.mxu0 0.0
        %2043 = vmatpush1.msra.mxu0 0.0
        %2044 = vmatprep.subr.mxu0 0.0
        %2045 = vmatpush1.msra.mxu0 0.0
        %2046 = vmatprep.subr.mxu0 0.0
        %2047 = vmatpush1.msra.mxu0 0.0
        %2048 = vmatprep.subr.mxu0 0.0
        %2049 = vmatpush1.msra.mxu0 0.0
        %2050 = vmatprep.subr.mxu0 0.0
        %2051 = vmatpush1.msra.mxu0 0.0
        %2052 = vmatprep.subr.mxu0 0.0
        %2053 = vmatpush1.msra.mxu0 0.0
        %2054 = vmatprep.subr.mxu0 0.0
        %2055 = vmatpush1.msra.mxu0 0.0
        %2056 = vmatprep.subr.mxu0 0.0
        %2057 = vmatpush1.msra.mxu0 0.0
        %2058 = vmatprep.subr.mxu0 0.0
        %2059 = vmatpush1.msra.mxu0 0.0
        %2060 = vmatprep.subr.mxu0 0.0
        %2061 = vmatpush1.msra.mxu0 0.0
        %2062 = vmatprep.subr.mxu0 0.0
        %2063 = vmatpush1.msra.mxu0 0.0
        %2064 = vmatprep.mubr.f32.mxu0 0.0
        %2065 = vmatmul.mubr.f32.gmra.mrb[0].mxu0 %v1998
        %v2066 = vpop.f32.mrb[0].mxu0
        %v2067 = vadd.f32 %v1995, %v2066
        %v2068 = vpop.f32.mrb[0].mxu0
        %2069 = vdwg.mxu0
        %v2070 = vadd.f32 %v1859, %v2067
        %v2071 = vld [vmem:[%s17] sm:$0xff]
        %v2072 = vmul.f32 %v2070, %v2071
        %v2073 = vsel %vm1025, %v2072, 0.0
        %2074 = vadd.xlane.f32.xlu0 %v2073
        %v2075 = vpop.xlane.xlu0 %2074
        %v2076 = vld [vmem:[%s18] sm:$0x1]
        %v2078 = vlaneseq
        %v2079 = vshrl.u32 %v2078, 7
        %v2080 = vsub.s32 0, %v2079
        %v2081 = vrot.slane %v2076, %v2080
        %2083 = vbcast.lane.b32.xlu0 %v2081, 256
        %v2084 = vpop.permute.xlu0 %2083
        %v2086 = vadd.f32 %v2075, %v2084
        %2088 = vset.pattern.permute.xlu0 0
        %2089 = vperm.xlu0 %2088, %v2086
        %v2090 = vpop.permute.xlu0 %2089
        %v2091 = vlaneseq
        %v2092 = vand.u32 %v2091, 127
        %v2093 = vlaneseq
        %v2094 = vshrl.u32 %v2093, 7
        %v2095 = vsub.s32 %v2092, %v2094
        %v2096 = vrot.slane %v2090, %v2095
        %vm2098 = vcmask 57344
        %2099 = vst.msk [vmem:[%s622] sm:$0x1] %vm2098, %v2096
        %s2100 = sand.u32 %s447, 1
        %s2101 = scalar_lea.sflag [#allocation3], %s2100
        %s2102 = sand.u32 %s447, 1
        %s2103 = scalar_lea.vmem [#allocation2], %s2102
        %p2104 = scmp.lt.s32.totalorder %s35, 1
        %s2105 = scalar_select %p2104, %s35, 1
        %s2106 = smul.addr %s2105, 2
        %s2107 = smul.addr %s2106, 8
        %s2108 = scalar_lea.vmem %s20, %s2107
        // Predicated region
        $region97: #{action_slot_forward.1} parent=95 // pred_check
          %p2109 = pneg %p457
        $region98: #{action_slot_forward.1} parent=95 // pred_check_branch
          %2111 = sbr.rel (%p2109) target = $region100
        $region99: #{action_slot_forward.1} parent=95 // pred_region
          %s2113 = ssub.s32 16, 16
          %2114 = vsyncadd %s2101, %s2113
          %s2115 = smul.addr %s35, 16
          %s2116 = scalar_lea.hbm %s19, %s2115
          %s2118 = sshll.u32 %s2103, 4
          %s2119 = int_to_ptr.vmem [resolvable:$true] %s2118
          %2121 = dma.vmem_to_hbm [thread:$0]  %s2119, 16, %s2116, %s2101
        $region100: #{action_slot_forward.1} parent=95 // pred_fallthru
          _
        // Predicated region
        $region101: #{action_slot_forward.1} parent=95 // pred_check
          %p2122 = pneg %p483
        $region102: #{action_slot_forward.1} parent=95 // pred_check_branch
          %2124 = sbr.rel (%p2122) target = $region104
        $region103: #{action_slot_forward.1} parent=95 // pred_region
          _
        $region104: #{action_slot_forward.1} parent=95 // pred_fallthru
          _
      $region96: #{action_slot_forward.1} parent=5 // pred_fallthru
        _
      %p2125 = scmp.le.s32.totalorder 2, %s30
      // Predicated region
      $region105: #{action_slot_forward.1} parent=5 // pred_check
        %p2126 = pneg %p2125
      $region106: #{action_slot_forward.1} parent=5 // pred_check_branch
        %2128 = sbr.rel (%p2126) target = $region108
      $region107: #{action_slot_forward.1} parent=5 // pred_region
        %s2129 = ssub.s32 %s30, 2
        // Predicated region
        $region109: #{action_slot_forward.1} parent=107 // pred_check
          %p2130 = pneg %p463
        $region110: #{action_slot_forward.1} parent=107 // pred_check_branch
          %2132 = sbr.rel (%p2130) target = $region112
        $region111: #{action_slot_forward.1} parent=107 // pred_region
          %s2133 = sand.u32 %s448, 1
          %s2134 = scalar_lea.sflag [#allocation3], %s2133
          %s2135 = sand.u32 %s448, 1
          %s2136 = scalar_lea.vmem [#allocation2], %s2135
          %2137 = dma.done %s2134, 16
        $region112: #{action_slot_forward.1} parent=107 // pred_fallthru
          _
        // Predicated region
        $region113: #{action_slot_forward.1} parent=107 // pred_check
          %p2138 = pneg %p489
        $region114: #{action_slot_forward.1} parent=107 // pred_check_branch
          %2140 = sbr.rel (%p2138) target = $region116
        $region115: #{action_slot_forward.1} parent=107 // pred_region
          %p2141 = scmp.lt.s32.totalorder %s36, 1
          %s2142 = scalar_select %p2141, %s36, 1
          %s2143 = smul.addr %s2142, 2
          %s2144 = smul.addr %s2143, 8
          %s2145 = scalar_lea.vmem %s20, %s2144
        $region116: #{action_slot_forward.1} parent=107 // pred_fallthru
          _
      $region108: #{action_slot_forward.1} parent=5 // pred_fallthru
        _
    $region6: #{action_slot_forward.1} parent=1 // loop_footer
      %s34 = sadd.s32 1, %s30
    $region7: #{action_slot_forward.1} parent=1 // loop_footer_branch
      %29 = sbr.rel target = $region3
    $region8: #{action_slot_forward.1} parent=1 // loop_exit
      _
    %2146 = vsyncpa [#allocation3], 1
    %s2147 = scalar_lea.sflag [#allocation3], 1
    %2148 = vsyncpa %s2147, 1

</llo_original>
